<compile_context>
chip_gen: v7x
topology: tpu7x:2x2x1
jax: 0.10.0
libtpu: 0.0.40
codegen_flags: <defaults>
</compile_context>

<pallas_src>
import functools

import jax
import jax.numpy as jnp
from jax.experimental import pallas as pl
from jax.experimental.pallas import tpu as pltpu

MIN_STD = 0.1
MAX_STD = 1.0
NEG_SLOPE = 1.0  # nn.LeakyReLU(True) -> negative_slope = float(True) = 1.0 (identity)
LANES = 128      # vreg lane width; every gate / head block is padded to this


def _leaky_relu(x, slope=NEG_SLOPE):
    if slope == 1.0:  # identity: elided at trace time (no dead VPU work)
        return x
    return jnp.where(x >= 0, x, slope * x)


def _round8(n):
    return ((n + 7) // 8) * 8


def _hslab_rows(SW, XW):
    """Row offsets of the fused head-weight slab (width = LANES)."""
    rWp = 0
    rWa = rWp + SW          # fused action layers (XW rows)
    rW1h = rWa + XW         # hidden -> layer 1    (LANES rows)
    rW1x = rW1h + LANES     # embed/bias -> layer1 (XW rows)
    rW1a = rW1x + XW        # action latents -> layer 1 (LANES rows)
    rW2 = rW1a + LANES      # fused layer 2        (LANES rows)
    rBn = rW2 + LANES       # b_hn tile            (Bp rows)
    return rWp, rWa, rW1h, rW1x, rW1a, rW2, rBn


def _rssm_kernel(state0_ref, xin_ref, gslab_ref, hslab_ref, out_ref, *,
                 T, Bp, E, A, H, L, AL):
    f32, bf16 = jnp.float32, jnp.bfloat16
    HP = LANES
    SW = state0_ref.shape[1]
    XW = xin_ref.shape[1]
    _, rWa, rW1h, rW1x, rW1a, rW2, rBn = _hslab_rows(SW, XW)
    scale = MAX_STD - MIN_STD
    inv_scale = 1.0 / scale

    # ---------------- Phase 1: sequential GRU recurrence (serial critical path) ----------------
    st = state0_ref[...]                      # (Bp, SW) f32: [h0 pad to 128 | z0 | 1 | 0]
    h = st[:, 0:HP]                           # h0, exactly zero beyond lane H (invariant below)
    st_bf = st.astype(bf16)

    # pre_gru_layer(z0): z is never updated in the reference loop -> one dot; the bias and the
    # constant-1 lane (x lane HP-1, used for the gate biases) ride on the packed ones-row.
    x = _leaky_relu(jnp.dot(st_bf, hslab_ref[0:SW, :], preferred_element_type=f32))
    # Input-side gates are loop-invariant -> hoisted.  Each gate occupies its own 128-lane block
    # so every per-step slice is a whole-vreg slice (no XLU relayouts inside the serial loop).
    # The packed bias row folds b_ih (all gates) + b_hh (r,z only); b_hn must stay inside r*(.).
    gxp = jnp.dot(x.astype(bf16), gslab_ref[0:HP, :], preferred_element_type=f32)  # (Bp, 3*HP)
    gx_r = gxp[:, 0:HP]
    gx_z = gxp[:, HP:2 * HP]
    gx_n = gxp[:, 2 * HP:3 * HP]

    whhF = gslab_ref[HP:2 * HP, :]                     # (HP, 3*HP) bf16, loop-invariant RHS
    bhh_n = hslab_ref[rBn:rBn + Bp, :].astype(f32)     # pre-tiled (Bp, HP) broadcast, hoisted

    hs_list = []
    # TODO(synk): at Dreamer-scale T switch to lax.fori_loop(unroll=small) + a VMEM scratch for hs.
    for _ in range(T):
        gh = jnp.dot(h.astype(bf16), whhF, preferred_element_type=f32)   # (Bp, 3*HP)
        r = jax.nn.sigmoid(gx_r + gh[:, 0:HP])
        zg = jax.nn.sigmoid(gx_z + gh[:, HP:2 * HP])
        n = jnp.tanh(gx_n + r * (gh[:, 2 * HP:3 * HP] + bhh_n))
        h = (1.0 - zg) * n + zg * h            # padded lanes stay exactly 0
        hs_list.append(h)

    hs = jnp.concatenate(hs_list, axis=0)      # (T*Bp, HP) f32, kept in vregs (no scratch trip)

    # ---------------- Phase 2: batched heads over all T*Bp rows (off the recurrence) ----------------
    hs_bf = hs.astype(bf16)
    xin = xin_ref[...]                         # (N, XW) f32: [emb | act | n_pr | n_po | 1 | 0]
    xin_bf = xin.astype(bf16)

    # Both action layers in ONE dot; zero rows in the packed weight select the action columns.
    la = _leaky_relu(jnp.dot(xin_bf, hslab_ref[rWa:rWa + XW, :],
                             preferred_element_type=f32))            # (N,128): [pla | qla | 0..]
    # Both first head layers fused into one block-structured output: hg = [h1 | g1 | 1 | 0..].
    hg = _leaky_relu(
        jnp.dot(hs_bf, hslab_ref[rW1h:rW1h + LANES, :], preferred_element_type=f32)
        + jnp.dot(xin_bf, hslab_ref[rW1x:rW1x + XW, :], preferred_element_type=f32)
        + jnp.dot(la.astype(bf16), hslab_ref[rW1a:rW1a + LANES, :], preferred_element_type=f32))
    # Both second head layers (mu & log_sigma, prior & posterior) in ONE block-diagonal dot.
    out4 = jnp.dot(hg.astype(bf16), hslab_ref[rW2:rW2 + LANES, :],
                   preferred_element_type=f32)                        # [pmu | qmu | pls | qls | 0..]

    mus = out4[:, 0:2 * L]
    lss = out4[:, 2 * L:4 * L]
    sigs = scale * jax.nn.sigmoid(lss * inv_scale) + MIN_STD
    noise = xin[:, E + A:E + A + 2 * L]        # [n_prior | n_posterior], f32
    samples = mus + noise * sigs

    # Fused lane-dense output slab: [h | pmu qmu | psig qsig | psamp qsamp]  (width H + 6L).
    out_ref[:, 0:H] = hs[:, 0:H]
    out_ref[:, H:H + 2 * L] = mus
    out_ref[:, H + 2 * L:H + 4 * L] = sigs
    out_ref[:, H + 4 * L:H + 6 * L] = samples


def _pack_weights(p, *, E, A, H, L, AL, SW, XW, Bp, dtype=jnp.bfloat16):
    """Pack the 25 weight/bias tensors into 2 lane-dense bf16 slabs (biases on ones-lanes)."""
    HP = LANES
    d_pr = H + AL
    d_po = H + E + AL
    d1 = d_pr + d_po
    _, rWa, rW1h, rW1x, rW1a, rW2, rBn = _hslab_rows(SW, XW)
    ones_x = E + A + 2 * L                     # ones-lane index inside the xin slab

    # ---- GRU slab (2*HP, 3*HP): [wih_padded ; whh_padded], gates lane-aligned to 128 ----
    G = jnp.zeros((2 * HP, 3 * HP), jnp.float32)
    for g in range(3):
        G = G.at[0:H, g * HP:g * HP + H].set(p["wih"][:, g * H:(g + 1) * H])
        bias = p["bih"][0, g * H:(g + 1) * H]
        if g < 2:                              # fold b_hh only for r,z; b_hn stays inside r*(.)
            bias = bias + p["bhh"][0, g * H:(g + 1) * H]
        G = G.at[HP - 1, g * HP:g * HP + H].set(bias)      # x's ones lane is lane HP-1
        G = G.at[HP:HP + H, g * HP:g * HP + H].set(p["whh"][:, g * H:(g + 1) * H])

    # ---- Head slab (rBn + Bp, LANES): prior cols [0,d_pr), posterior cols [d_pr, d1) ----
    Hs = jnp.zeros((rBn + Bp, LANES), jnp.float32)
    # WpF: pre_gru linear (fed by the z0 rows of the state slab) + bias/ones row
    Hs = Hs.at[HP:HP + L, 0:H].set(p["wp"])
    Hs = Hs.at[HP + L, 0:H].set(p["bp"][0])
    Hs = Hs.at[HP + L, HP - 1].set(1.0)        # propagate the ones-lane into x for gate biases
    # WaF: prior/posterior action layers fused
    Hs = Hs.at[rWa + E:rWa + E + A, 0:AL].set(p["wapr"])
    Hs = Hs.at[rWa + E:rWa + E + A, AL:2 * AL].set(p["wapo"])
    Hs = Hs.at[rWa + ones_x, 0:AL].set(p["bapr"][0])
    Hs = Hs.at[rWa + ones_x, AL:2 * AL].set(p["bapo"][0])
    # W1h: hidden -> first head layers of both branches
    Hs = Hs.at[rW1h:rW1h + H, 0:d_pr].set(p["pr_w1h"])
    Hs = Hs.at[rW1h:rW1h + H, d_pr:d1].set(p["po_w1h"])
    # W1x: embed -> posterior layer 1; ones row carries both b1 vectors + the hg ones-lane
    Hs = Hs.at[rW1x:rW1x + E, d_pr:d1].set(p["po_w1e"])
    Hs = Hs.at[rW1x + ones_x, 0:d_pr].set(p["pr_b1"][0])
    Hs = Hs.at[rW1x + ones_x, d_pr:d1].set(p["po_b1"][0])
    Hs = Hs.at[rW1x + ones_x, d1].set(1.0)
    # W1a: action latents -> first head layers
    Hs = Hs.at[rW1a:rW1a + AL, 0:d_pr].set(p["pr_w1a"])
    Hs = Hs.at[rW1a + AL:rW1a + 2 * AL, d_pr:d1].set(p["po_w1a"])
    # W2: block-diagonal second layers; output cols = [pmu | qmu | pls | qls]
    Hs = Hs.at[rW2:rW2 + d_pr, 0:L].set(p["pr_w2mu"])
    Hs = Hs.at[rW2:rW2 + d_pr, 2 * L:3 * L].set(p["pr_w2ls"])
    Hs = Hs.at[rW2 + d_pr:rW2 + d1, L:2 * L].set(p["po_w2mu"])
    Hs = Hs.at[rW2 + d_pr:rW2 + d1, 3 * L:4 * L].set(p["po_w2ls"])
    Hs = Hs.at[rW2 + d1, 0:L].set(p["pr_b2mu"][0])
    Hs = Hs.at[rW2 + d1, L:2 * L].set(p["po_b2mu"][0])
    Hs = Hs.at[rW2 + d1, 2 * L:3 * L].set(p["pr_b2ls"][0])
    Hs = Hs.at[rW2 + d1, 3 * L:4 * L].set(p["po_b2ls"][0])
    # b_hn, pre-tiled to (Bp, LANES) so the in-loop add needs no per-step broadcast op
    Hs = Hs.at[rBn:rBn + Bp, 0:H].set(jnp.broadcast_to(p["bhh"][:, 2 * H:3 * H], (Bp, H)))
    return G.astype(dtype), Hs.astype(dtype)


def rssm_forward(params, embeds, actions, h0, z0, noise_prior, noise_post):
    T, B, E = embeds.shape
    A = actions.shape[-1]
    H = h0.shape[-1]
    L = z0.shape[-1]
    AL = params["wapr"].shape[-1]
    d1 = (H + AL) + (H + E + AL)
    # TODO(synk): for larger dims (H >= 128 or fused head width >= 128) tile the head blocks and
    # grid Phase 2 over row tiles (needed anyway for v7x's 64 MiB VMEM / dual-TC at Dreamer scale).
    assert H < LANES and d1 < LANES and 4 * L <= LANES and 2 * AL <= LANES

    # Pad batch to a multiple of 8 so every (B, F) tile fills all vreg sublanes.
    Bp = max(8, _round8(B))
    if Bp != B:
        pb = Bp - B
        embeds = jnp.pad(embeds, ((0, 0), (0, pb), (0, 0)))
        actions = jnp.pad(actions, ((0, 0), (0, pb), (0, 0)))
        noise_prior = jnp.pad(noise_prior, ((0, 0), (0, pb), (0, 0)))
        noise_post = jnp.pad(noise_post, ((0, 0), (0, pb), (0, 0)))
        h0 = jnp.pad(h0, ((0, pb), (0, 0)))
        z0 = jnp.pad(z0, ((0, pb), (0, 0)))
    N = T * Bp

    # ---- pack the 6 activation tensors into 2 lane-dense f32 slabs (2 DMAs instead of 6) ----
    SW = _round8(LANES + L + 1)                # [h0 pad to 128 | z0 | 1 | pad]
    state0 = jnp.zeros((Bp, SW), jnp.float32)
    state0 = state0.at[:, 0:H].set(h0)
    state0 = state0.at[:, LANES:LANES + L].set(z0)
    state0 = state0.at[:, LANES + L].set(1.0)

    XW = _round8(E + A + 2 * L + 1)            # [emb | act | n_pr | n_po | 1 | pad]
    xin = jnp.zeros((N, XW), jnp.float32)
    xin = xin.at[:, 0:E].set(embeds.reshape(N, E))
    xin = xin.at[:, E:E + A].set(actions.reshape(N, A))
    xin = xin.at[:, E + A:E + A + L].set(noise_prior.reshape(N, L))
    xin = xin.at[:, E + A + L:E + A + 2 * L].set(noise_post.reshape(N, L))
    xin = xin.at[:, E + A + 2 * L].set(1.0)

    # ---- pack the 25 weights/biases into 2 bf16 slabs (2 DMAs instead of 25) ----
    gslab, hslab = _pack_weights(params, E=E, A=A, H=H, L=L, AL=AL, SW=SW, XW=XW, Bp=Bp)

    W = H + 6 * L
    vmem = pl.BlockSpec(memory_space=pltpu.MemorySpace.VMEM)
    out = pl.pallas_call(
        functools.partial(_rssm_kernel, T=T, Bp=Bp, E=E, A=A, H=H, L=L, AL=AL),
        out_shape=jax.ShapeDtypeStruct((N, W), jnp.float32),
        in_specs=[vmem] * 4,
        out_specs=vmem,
        # TODO(synk): at production sizes add pltpu.CompilerParams(vmem_limit_bytes=...) and a
        # "parallel" row-tile grid for Phase 2 (v5e 16 MiB scoped VMEM default; v7x 2 TensorCores).
    )(state0, xin, gslab, hslab)

    slab = out.reshape(T, Bp, W)[:, :B]
    hs = slab[..., 0:H]
    pmu = slab[..., H:H + L]
    qmu = slab[..., H + L:H + 2 * L]
    psig = slab[..., H + 2 * L:H + 3 * L]
    qsig = slab[..., H + 3 * L:H + 4 * L]
    psamp = slab[..., H + 4 * L:H + 5 * L]
    qsamp = slab[..., H + 5 * L:H + 6 * L]
    return hs, pmu, psig, psamp, qmu, qsig, qsamp


def init_params(key, embed_dim, action_dim, hidden_dim, latent_dim, action_latent_dim):
    keys = iter(jax.random.split(key, 64))

    def lin(in_d, out_d):
        k = 1.0 / jnp.sqrt(jnp.float32(in_d))
        w = jax.random.uniform(next(keys), (in_d, out_d), jnp.float32, -k, k)
        b = jax.random.uniform(next(keys), (1, out_d), jnp.float32, -k, k)
        return w, b

    p = {}
    # pre_gru_layer
    p["wp"], p["bp"] = lin(latent_dim, hidden_dim)
    # GRUCell, gate order (r, z, n), packed column-wise -> (H, 3H)
    kg = 1.0 / jnp.sqrt(jnp.float32(hidden_dim))
    p["wih"] = jax.random.uniform(next(keys), (hidden_dim, 3 * hidden_dim), jnp.float32, -kg, kg)
    p["whh"] = jax.random.uniform(next(keys), (hidden_dim, 3 * hidden_dim), jnp.float32, -kg, kg)
    p["bih"] = jax.random.uniform(next(keys), (1, 3 * hidden_dim), jnp.float32, -kg, kg)
    p["bhh"] = jax.random.uniform(next(keys), (1, 3 * hidden_dim), jnp.float32, -kg, kg)
    # action layers
    p["wapr"], p["bapr"] = lin(action_dim, action_latent_dim)
    p["wapo"], p["bapo"] = lin(action_dim, action_latent_dim)
    # prior RepresentationModel (in_dim = hidden + action_latent)
    d_pr = hidden_dim + action_latent_dim
    w1, b1 = lin(d_pr, d_pr)
    p["pr_w1h"] = w1[:hidden_dim]
    p["pr_w1a"] = w1[hidden_dim:]
    p["pr_b1"] = b1
    w2, b2 = lin(d_pr, 2 * latent_dim)
    p["pr_w2mu"], p["pr_w2ls"] = w2[:, :latent_dim], w2[:, latent_dim:]
    p["pr_b2mu"], p["pr_b2ls"] = b2[:, :latent_dim], b2[:, latent_dim:]
    # posterior RepresentationModel (in_dim = hidden + embed + action_latent)
    d_po = hidden_dim + embed_dim + action_latent_dim
    w1, b1 = lin(d_po, d_po)
    p["po_w1h"] = w1[:hidden_dim]
    p["po_w1e"] = w1[hidden_dim:hidden_dim + embed_dim]
    p["po_w1a"] = w1[hidden_dim + embed_dim:]
    p["po_b1"] = b1
    w2, b2 = lin(d_po, 2 * latent_dim)
    p["po_w2mu"], p["po_w2ls"] = w2[:, :latent_dim], w2[:, latent_dim:]
    p["po_b2mu"], p["po_b2ls"] = b2[:, :latent_dim], b2[:, latent_dim:]
    return p


def rssm_reference(params, embeds, actions, h0, z0, noise_prior, noise_post):
    """Pure-JAX reference mirroring the PyTorch forward (same packed-weight layout)."""
    p = params
    T = embeds.shape[0]
    H = h0.shape[-1]
    lr = _leaky_relu
    scale = MAX_STD - MIN_STD
    h = h0
    z = z0
    outs = [[] for _ in range(7)]
    for t in range(T):
        in_t = lr(z @ p["wp"] + p["bp"])  # recomputed each step, like the PyTorch loop (z never updated)
        gx = in_t @ p["wih"] + p["bih"]
        gh = h @ p["whh"] + p["bhh"]
        r = jax.nn.sigmoid(gx[:, :H] + gh[:, :H])
        zg = jax.nn.sigmoid(gx[:, H:2 * H] + gh[:, H:2 * H])
        n = jnp.tanh(gx[:, 2 * H:] + r * gh[:, 2 * H:])
        h = (1.0 - zg) * n + zg * h
        a, e = actions[t], embeds[t]
        pla = lr(a @ p["wapr"] + p["bapr"])
        h1 = lr(h @ p["pr_w1h"] + pla @ p["pr_w1a"] + p["pr_b1"])
        pmu = h1 @ p["pr_w2mu"] + p["pr_b2mu"]
        psig = scale * jax.nn.sigmoid((h1 @ p["pr_w2ls"] + p["pr_b2ls"]) / scale) + MIN_STD
        psamp = pmu + noise_prior[t] * psig
        qla = lr(a @ p["wapo"] + p["bapo"])
        g1 = lr(h @ p["po_w1h"] + e @ p["po_w1e"] + qla @ p["po_w1a"] + p["po_b1"])
        qmu = g1 @ p["po_w2mu"] + p["po_b2mu"]
        qsig = scale * jax.nn.sigmoid((g1 @ p["po_w2ls"] + p["po_b2ls"]) / scale) + MIN_STD
        qsamp = qmu + noise_post[t] * qsig
        for lst, v in zip(outs, [h, pmu, psig, psamp, qmu, qsig, qsamp]):
            lst.append(v)
    return tuple(jnp.stack(o) for o in outs)


if __name__ == "__main__":
    embed_dim, action_dim = 32, 8
    hidden_dim, latent_dim, action_latent_dim = 32, 16, 8
    T, B = 6, 4

    key = jax.random.PRNGKey(0)
    kp, ke, ka, kh, kz, kn1, kn2 = jax.random.split(key, 7)

    params = init_params(kp, embed_dim, action_dim, hidden_dim, latent_dim, action_latent_dim)
    embeds = jax.random.normal(ke, (T, B, embed_dim), jnp.float32)
    actions = jax.random.normal(ka, (T, B, action_dim), jnp.float32)
    h0 = jax.random.normal(kh, (B, hidden_dim), jnp.float32)
    z0 = jax.random.normal(kz, (B, latent_dim), jnp.float32)
    # torch.randn_like noise is generated host-side and fed in (no in-kernel RNG needed).
    noise_prior = jax.random.normal(kn1, (T, B, latent_dim), jnp.float32)
    noise_post = jax.random.normal(kn2, (T, B, latent_dim), jnp.float32)

    outs = rssm_forward(params, embeds, actions, h0, z0, noise_prior, noise_post)
    outs = jax.block_until_ready(outs)

    # Reference at full f32 matmul precision.  The kernel uses bf16 MXU operands with f32
    # accumulation (per the perf review), so the tolerance allows bf16-level matmul error.
    with jax.default_matmul_precision("float32"):
        refs = rssm_reference(params, embeds, actions, h0, z0, noise_prior, noise_post)
        refs = jax.block_until_ready(refs)

    names = ["hidden_states", "prior_mus", "prior_sigmas", "prior_samples",
             "posterior_mus", "posterior_sigmas", "posterior_samples"]
    for name, o, r in zip(names, outs, refs):
        assert o.shape == r.shape, (name, o.shape, r.shape)
        assert jnp.allclose(o, r, atol=3e-2, rtol=3e-2), f"mismatch in {name}"

    print("KERNEL_OK")
</pallas_src>

<mosaic_0001>
module attributes {stable_mosaic.version = 11 : i64} {
  func.func @_rssm_kernel(%arg0: memref<8x152xf32, #tpu.memory_space<vmem>>, %arg1: memref<48x80xf32, #tpu.memory_space<vmem>>, %arg2: memref<256x384xbf16, #tpu.memory_space<vmem>>, %arg3: memref<704x128xbf16, #tpu.memory_space<vmem>>, %arg4: memref<48x128xf32, #tpu.memory_space<vmem>>) attributes {dimension_semantics = [], scalar_prefetch = 0 : i64, scratch_operands = 0 : i64, tpu.core_type = #tpu.core_type<tc>} {
    %c0 = arith.constant 0 : index
    %c0_0 = arith.constant 0 : index
    %0 = vector.load %arg0[%c0, %c0_0] : memref<8x152xf32, #tpu.memory_space<vmem>>, vector<8x152xf32>
    %1 = vector.extract_strided_slice %0 {offsets = [0, 0], sizes = [8, 128], strides = [1, 1]} : vector<8x152xf32> to vector<8x128xf32>
    %2 = arith.truncf %0 : vector<8x152xf32> to vector<8x152xbf16>
    %c0_1 = arith.constant 0 : index
    %c0_2 = arith.constant 0 : index
    %3 = vector.load %arg3[%c0_1, %c0_2] : memref<704x128xbf16, #tpu.memory_space<vmem>>, vector<152x128xbf16>
    %cst = arith.constant dense<0.000000e+00> : vector<8x128xf32>
    %4 = tpu.matmul %2, %3, %cst {dimension_numbers = #tpu.dot_dimension_numbers<[1], [0], [0], [1], [0, 0, 1, 1], [], []>} : vector<8x152xbf16>, vector<152x128xbf16>, vector<8x128xf32> -> vector<8x128xf32>
    %5 = arith.truncf %4 : vector<8x128xf32> to vector<8x128xbf16>
    %c0_3 = arith.constant 0 : index
    %c0_4 = arith.constant 0 : index
    %6 = vector.load %arg2[%c0_3, %c0_4] : memref<256x384xbf16, #tpu.memory_space<vmem>>, vector<128x384xbf16>
    %cst_5 = arith.constant dense<0.000000e+00> : vector<8x384xf32>
    %7 = tpu.matmul %5, %6, %cst_5 {dimension_numbers = #tpu.dot_dimension_numbers<[1], [0], [0], [1], [0, 0, 1, 1], [], []>} : vector<8x128xbf16>, vector<128x384xbf16>, vector<8x384xf32> -> vector<8x384xf32>
    %8 = vector.extract_strided_slice %7 {offsets = [0, 0], sizes = [8, 128], strides = [1, 1]} : vector<8x384xf32> to vector<8x128xf32>
    %9 = vector.extract_strided_slice %7 {offsets = [0, 128], sizes = [8, 128], strides = [1, 1]} : vector<8x384xf32> to vector<8x128xf32>
    %10 = vector.extract_strided_slice %7 {offsets = [0, 256], sizes = [8, 128], strides = [1, 1]} : vector<8x384xf32> to vector<8x128xf32>
    %c128 = arith.constant 128 : index
    %c0_6 = arith.constant 0 : index
    %11 = vector.load %arg2[%c128, %c0_6] : memref<256x384xbf16, #tpu.memory_space<vmem>>, vector<128x384xbf16>
    %c696 = arith.constant 696 : index
    %c0_7 = arith.constant 0 : index
    %12 = vector.load %arg3[%c696, %c0_7] : memref<704x128xbf16, #tpu.memory_space<vmem>>, vector<8x128xbf16>
    %13 = arith.extf %12 : vector<8x128xbf16> to vector<8x128xf32>
    %14 = arith.truncf %1 : vector<8x128xf32> to vector<8x128xbf16>
    %cst_8 = arith.constant dense<0.000000e+00> : vector<8x384xf32>
    %15 = tpu.matmul %14, %11, %cst_8 {dimension_numbers = #tpu.dot_dimension_numbers<[1], [0], [0], [1], [0, 0, 1, 1], [], []>} : vector<8x128xbf16>, vector<128x384xbf16>, vector<8x384xf32> -> vector<8x384xf32>
    %16 = vector.extract_strided_slice %15 {offsets = [0, 0], sizes = [8, 128], strides = [1, 1]} : vector<8x384xf32> to vector<8x128xf32>
    %17 = arith.addf %8, %16 : vector<8x128xf32>
    %18 = arith.negf %17 : vector<8x128xf32>
    %19 = math.exp %18 : vector<8x128xf32>
    %cst_9 = arith.constant 1.000000e+00 : f32
    %20 = vector.broadcast %cst_9 : f32 to vector<8x128xf32>
    %21 = arith.addf %20, %19 : vector<8x128xf32>
    %22 = arith.divf %20, %21 : vector<8x128xf32>
    %23 = vector.extract_strided_slice %15 {offsets = [0, 128], sizes = [8, 128], strides = [1, 1]} : vector<8x384xf32> to vector<8x128xf32>
    %24 = arith.addf %9, %23 : vector<8x128xf32>
    %25 = arith.negf %24 : vector<8x128xf32>
    %26 = math.exp %25 : vector<8x128xf32>
    %cst_10 = arith.constant 1.000000e+00 : f32
    %27 = vector.broadcast %cst_10 : f32 to vector<8x128xf32>
    %28 = arith.addf %27, %26 : vector<8x128xf32>
    %29 = arith.divf %27, %28 : vector<8x128xf32>
    %30 = vector.extract_strided_slice %15 {offsets = [0, 256], sizes = [8, 128], strides = [1, 1]} : vector<8x384xf32> to vector<8x128xf32>
    %31 = arith.addf %30, %13 : vector<8x128xf32>
    %32 = arith.mulf %22, %31 : vector<8x128xf32>
    %33 = arith.addf %10, %32 : vector<8x128xf32>
    %34 = math.tanh %33 : vector<8x128xf32>
    %cst_11 = arith.constant 1.000000e+00 : f32
    %35 = vector.broadcast %cst_11 : f32 to vector<8x128xf32>
    %36 = arith.subf %35, %29 : vector<8x128xf32>
    %37 = arith.mulf %36, %34 : vector<8x128xf32>
    %38 = arith.mulf %29, %1 : vector<8x128xf32>
    %39 = arith.addf %37, %38 : vector<8x128xf32>
    %40 = arith.truncf %39 : vector<8x128xf32> to vector<8x128xbf16>
    %cst_12 = arith.constant dense<0.000000e+00> : vector<8x384xf32>
    %41 = tpu.matmul %40, %11, %cst_12 {dimension_numbers = #tpu.dot_dimension_numbers<[1], [0], [0], [1], [0, 0, 1, 1], [], []>} : vector<8x128xbf16>, vector<128x384xbf16>, vector<8x384xf32> -> vector<8x384xf32>
    %42 = vector.extract_strided_slice %41 {offsets = [0, 0], sizes = [8, 128], strides = [1, 1]} : vector<8x384xf32> to vector<8x128xf32>
    %43 = arith.addf %8, %42 : vector<8x128xf32>
    %44 = arith.negf %43 : vector<8x128xf32>
    %45 = math.exp %44 : vector<8x128xf32>
    %cst_13 = arith.constant 1.000000e+00 : f32
    %46 = vector.broadcast %cst_13 : f32 to vector<8x128xf32>
    %47 = arith.addf %46, %45 : vector<8x128xf32>
    %48 = arith.divf %46, %47 : vector<8x128xf32>
    %49 = vector.extract_strided_slice %41 {offsets = [0, 128], sizes = [8, 128], strides = [1, 1]} : vector<8x384xf32> to vector<8x128xf32>
    %50 = arith.addf %9, %49 : vector<8x128xf32>
    %51 = arith.negf %50 : vector<8x128xf32>
    %52 = math.exp %51 : vector<8x128xf32>
    %cst_14 = arith.constant 1.000000e+00 : f32
    %53 = vector.broadcast %cst_14 : f32 to vector<8x128xf32>
    %54 = arith.addf %53, %52 : vector<8x128xf32>
    %55 = arith.divf %53, %54 : vector<8x128xf32>
    %56 = vector.extract_strided_slice %41 {offsets = [0, 256], sizes = [8, 128], strides = [1, 1]} : vector<8x384xf32> to vector<8x128xf32>
    %57 = arith.addf %56, %13 : vector<8x128xf32>
    %58 = arith.mulf %48, %57 : vector<8x128xf32>
    %59 = arith.addf %10, %58 : vector<8x128xf32>
    %60 = math.tanh %59 : vector<8x128xf32>
    %cst_15 = arith.constant 1.000000e+00 : f32
    %61 = vector.broadcast %cst_15 : f32 to vector<8x128xf32>
    %62 = arith.subf %61, %55 : vector<8x128xf32>
    %63 = arith.mulf %62, %60 : vector<8x128xf32>
    %64 = arith.mulf %55, %39 : vector<8x128xf32>
    %65 = arith.addf %63, %64 : vector<8x128xf32>
    %66 = arith.truncf %65 : vector<8x128xf32> to vector<8x128xbf16>
    %cst_16 = arith.constant dense<0.000000e+00> : vector<8x384xf32>
    %67 = tpu.matmul %66, %11, %cst_16 {dimension_numbers = #tpu.dot_dimension_numbers<[1], [0], [0], [1], [0, 0, 1, 1], [], []>} : vector<8x128xbf16>, vector<128x384xbf16>, vector<8x384xf32> -> vector<8x384xf32>
    %68 = vector.extract_strided_slice %67 {offsets = [0, 0], sizes = [8, 128], strides = [1, 1]} : vector<8x384xf32> to vector<8x128xf32>
    %69 = arith.addf %8, %68 : vector<8x128xf32>
    %70 = arith.negf %69 : vector<8x128xf32>
    %71 = math.exp %70 : vector<8x128xf32>
    %cst_17 = arith.constant 1.000000e+00 : f32
    %72 = vector.broadcast %cst_17 : f32 to vector<8x128xf32>
    %73 = arith.addf %72, %71 : vector<8x128xf32>
    %74 = arith.divf %72, %73 : vector<8x128xf32>
    %75 = vector.extract_strided_slice %67 {offsets = [0, 128], sizes = [8, 128], strides = [1, 1]} : vector<8x384xf32> to vector<8x128xf32>
    %76 = arith.addf %9, %75 : vector<8x128xf32>
    %77 = arith.negf %76 : vector<8x128xf32>
    %78 = math.exp %77 : vector<8x128xf32>
    %cst_18 = arith.constant 1.000000e+00 : f32
    %79 = vector.broadcast %cst_18 : f32 to vector<8x128xf32>
    %80 = arith.addf %79, %78 : vector<8x128xf32>
    %81 = arith.divf %79, %80 : vector<8x128xf32>
    %82 = vector.extract_strided_slice %67 {offsets = [0, 256], sizes = [8, 128], strides = [1, 1]} : vector<8x384xf32> to vector<8x128xf32>
    %83 = arith.addf %82, %13 : vector<8x128xf32>
    %84 = arith.mulf %74, %83 : vector<8x128xf32>
    %85 = arith.addf %10, %84 : vector<8x128xf32>
    %86 = math.tanh %85 : vector<8x128xf32>
    %cst_19 = arith.constant 1.000000e+00 : f32
    %87 = vector.broadcast %cst_19 : f32 to vector<8x128xf32>
    %88 = arith.subf %87, %81 : vector<8x128xf32>
    %89 = arith.mulf %88, %86 : vector<8x128xf32>
    %90 = arith.mulf %81, %65 : vector<8x128xf32>
    %91 = arith.addf %89, %90 : vector<8x128xf32>
    %92 = arith.truncf %91 : vector<8x128xf32> to vector<8x128xbf16>
    %cst_20 = arith.constant dense<0.000000e+00> : vector<8x384xf32>
    %93 = tpu.matmul %92, %11, %cst_20 {dimension_numbers = #tpu.dot_dimension_numbers<[1], [0], [0], [1], [0, 0, 1, 1], [], []>} : vector<8x128xbf16>, vector<128x384xbf16>, vector<8x384xf32> -> vector<8x384xf32>
    %94 = vector.extract_strided_slice %93 {offsets = [0, 0], sizes = [8, 128], strides = [1, 1]} : vector<8x384xf32> to vector<8x128xf32>
    %95 = arith.addf %8, %94 : vector<8x128xf32>
    %96 = arith.negf %95 : vector<8x128xf32>
    %97 = math.exp %96 : vector<8x128xf32>
    %cst_21 = arith.constant 1.000000e+00 : f32
    %98 = vector.broadcast %cst_21 : f32 to vector<8x128xf32>
    %99 = arith.addf %98, %97 : vector<8x128xf32>
    %100 = arith.divf %98, %99 : vector<8x128xf32>
    %101 = vector.extract_strided_slice %93 {offsets = [0, 128], sizes = [8, 128], strides = [1, 1]} : vector<8x384xf32> to vector<8x128xf32>
    %102 = arith.addf %9, %101 : vector<8x128xf32>
    %103 = arith.negf %102 : vector<8x128xf32>
    %104 = math.exp %103 : vector<8x128xf32>
    %cst_22 = arith.constant 1.000000e+00 : f32
    %105 = vector.broadcast %cst_22 : f32 to vector<8x128xf32>
    %106 = arith.addf %105, %104 : vector<8x128xf32>
    %107 = arith.divf %105, %106 : vector<8x128xf32>
    %108 = vector.extract_strided_slice %93 {offsets = [0, 256], sizes = [8, 128], strides = [1, 1]} : vector<8x384xf32> to vector<8x128xf32>
    %109 = arith.addf %108, %13 : vector<8x128xf32>
    %110 = arith.mulf %100, %109 : vector<8x128xf32>
    %111 = arith.addf %10, %110 : vector<8x128xf32>
    %112 = math.tanh %111 : vector<8x128xf32>
    %cst_23 = arith.constant 1.000000e+00 : f32
    %113 = vector.broadcast %cst_23 : f32 to vector<8x128xf32>
    %114 = arith.subf %113, %107 : vector<8x128xf32>
    %115 = arith.mulf %114, %112 : vector<8x128xf32>
    %116 = arith.mulf %107, %91 : vector<8x128xf32>
    %117 = arith.addf %115, %116 : vector<8x128xf32>
    %118 = arith.truncf %117 : vector<8x128xf32> to vector<8x128xbf16>
    %cst_24 = arith.constant dense<0.000000e+00> : vector<8x384xf32>
    %119 = tpu.matmul %118, %11, %cst_24 {dimension_numbers = #tpu.dot_dimension_numbers<[1], [0], [0], [1], [0, 0, 1, 1], [], []>} : vector<8x128xbf16>, vector<128x384xbf16>, vector<8x384xf32> -> vector<8x384xf32>
    %120 = vector.extract_strided_slice %119 {offsets = [0, 0], sizes = [8, 128], strides = [1, 1]} : vector<8x384xf32> to vector<8x128xf32>
    %121 = arith.addf %8, %120 : vector<8x128xf32>
    %122 = arith.negf %121 : vector<8x128xf32>
    %123 = math.exp %122 : vector<8x128xf32>
    %cst_25 = arith.constant 1.000000e+00 : f32
    %124 = vector.broadcast %cst_25 : f32 to vector<8x128xf32>
    %125 = arith.addf %124, %123 : vector<8x128xf32>
    %126 = arith.divf %124, %125 : vector<8x128xf32>
    %127 = vector.extract_strided_slice %119 {offsets = [0, 128], sizes = [8, 128], strides = [1, 1]} : vector<8x384xf32> to vector<8x128xf32>
    %128 = arith.addf %9, %127 : vector<8x128xf32>
    %129 = arith.negf %128 : vector<8x128xf32>
    %130 = math.exp %129 : vector<8x128xf32>
    %cst_26 = arith.constant 1.000000e+00 : f32
    %131 = vector.broadcast %cst_26 : f32 to vector<8x128xf32>
    %132 = arith.addf %131, %130 : vector<8x128xf32>
    %133 = arith.divf %131, %132 : vector<8x128xf32>
    %134 = vector.extract_strided_slice %119 {offsets = [0, 256], sizes = [8, 128], strides = [1, 1]} : vector<8x384xf32> to vector<8x128xf32>
    %135 = arith.addf %134, %13 : vector<8x128xf32>
    %136 = arith.mulf %126, %135 : vector<8x128xf32>
    %137 = arith.addf %10, %136 : vector<8x128xf32>
    %138 = math.tanh %137 : vector<8x128xf32>
    %cst_27 = arith.constant 1.000000e+00 : f32
    %139 = vector.broadcast %cst_27 : f32 to vector<8x128xf32>
    %140 = arith.subf %139, %133 : vector<8x128xf32>
    %141 = arith.mulf %140, %138 : vector<8x128xf32>
    %142 = arith.mulf %133, %117 : vector<8x128xf32>
    %143 = arith.addf %141, %142 : vector<8x128xf32>
    %144 = arith.truncf %143 : vector<8x128xf32> to vector<8x128xbf16>
    %cst_28 = arith.constant dense<0.000000e+00> : vector<8x384xf32>
    %145 = tpu.matmul %144, %11, %cst_28 {dimension_numbers = #tpu.dot_dimension_numbers<[1], [0], [0], [1], [0, 0, 1, 1], [], []>} : vector<8x128xbf16>, vector<128x384xbf16>, vector<8x384xf32> -> vector<8x384xf32>
    %146 = vector.extract_strided_slice %145 {offsets = [0, 0], sizes = [8, 128], strides = [1, 1]} : vector<8x384xf32> to vector<8x128xf32>
    %147 = arith.addf %8, %146 : vector<8x128xf32>
    %148 = arith.negf %147 : vector<8x128xf32>
    %149 = math.exp %148 : vector<8x128xf32>
    %cst_29 = arith.constant 1.000000e+00 : f32
    %150 = vector.broadcast %cst_29 : f32 to vector<8x128xf32>
    %151 = arith.addf %150, %149 : vector<8x128xf32>
    %152 = arith.divf %150, %151 : vector<8x128xf32>
    %153 = vector.extract_strided_slice %145 {offsets = [0, 128], sizes = [8, 128], strides = [1, 1]} : vector<8x384xf32> to vector<8x128xf32>
    %154 = arith.addf %9, %153 : vector<8x128xf32>
    %155 = arith.negf %154 : vector<8x128xf32>
    %156 = math.exp %155 : vector<8x128xf32>
    %cst_30 = arith.constant 1.000000e+00 : f32
    %157 = vector.broadcast %cst_30 : f32 to vector<8x128xf32>
    %158 = arith.addf %157, %156 : vector<8x128xf32>
    %159 = arith.divf %157, %158 : vector<8x128xf32>
    %160 = vector.extract_strided_slice %145 {offsets = [0, 256], sizes = [8, 128], strides = [1, 1]} : vector<8x384xf32> to vector<8x128xf32>
    %161 = arith.addf %160, %13 : vector<8x128xf32>
    %162 = arith.mulf %152, %161 : vector<8x128xf32>
    %163 = arith.addf %10, %162 : vector<8x128xf32>
    %164 = math.tanh %163 : vector<8x128xf32>
    %cst_31 = arith.constant 1.000000e+00 : f32
    %165 = vector.broadcast %cst_31 : f32 to vector<8x128xf32>
    %166 = arith.subf %165, %159 : vector<8x128xf32>
    %167 = arith.mulf %166, %164 : vector<8x128xf32>
    %168 = arith.mulf %159, %143 : vector<8x128xf32>
    %169 = arith.addf %167, %168 : vector<8x128xf32>
    %170 = tpu.concatenate %39, %65, %91, %117, %143, %169 in 0 : vector<8x128xf32>, vector<8x128xf32>, vector<8x128xf32>, vector<8x128xf32>, vector<8x128xf32>, vector<8x128xf32> -> vector<48x128xf32>
    %171 = arith.truncf %170 : vector<48x128xf32> to vector<48x128xbf16>
    %c0_32 = arith.constant 0 : index
    %c0_33 = arith.constant 0 : index
    %172 = vector.load %arg1[%c0_32, %c0_33] : memref<48x80xf32, #tpu.memory_space<vmem>>, vector<48x80xf32>
    %173 = arith.truncf %172 : vector<48x80xf32> to vector<48x80xbf16>
    %c152 = arith.constant 152 : index
    %c0_34 = arith.constant 0 : index
    %174 = vector.load %arg3[%c152, %c0_34] : memref<704x128xbf16, #tpu.memory_space<vmem>>, vector<80x128xbf16>
    %cst_35 = arith.constant dense<0.000000e+00> : vector<48x128xf32>
    %175 = tpu.matmul %173, %174, %cst_35 {dimension_numbers = #tpu.dot_dimension_numbers<[1], [0], [0], [1], [0, 0, 1, 1], [], []>} : vector<48x80xbf16>, vector<80x128xbf16>, vector<48x128xf32> -> vector<48x128xf32>
    %c232 = arith.constant 232 : index
    %c0_36 = arith.constant 0 : index
    %176 = vector.load %arg3[%c232, %c0_36] : memref<704x128xbf16, #tpu.memory_space<vmem>>, vector<128x128xbf16>
    %cst_37 = arith.constant dense<0.000000e+00> : vector<48x128xf32>
    %177 = tpu.matmul %171, %176, %cst_37 {dimension_numbers = #tpu.dot_dimension_numbers<[1], [0], [0], [1], [0, 0, 1, 1], [], []>} : vector<48x128xbf16>, vector<128x128xbf16>, vector<48x128xf32> -> vector<48x128xf32>
    %c360 = arith.constant 360 : index
    %c0_38 = arith.constant 0 : index
    %178 = vector.load %arg3[%c360, %c0_38] : memref<704x128xbf16, #tpu.memory_space<vmem>>, vector<80x128xbf16>
    %cst_39 = arith.constant dense<0.000000e+00> : vector<48x128xf32>
    %179 = tpu.matmul %173, %178, %cst_39 {dimension_numbers = #tpu.dot_dimension_numbers<[1], [0], [0], [1], [0, 0, 1, 1], [], []>} : vector<48x80xbf16>, vector<80x128xbf16>, vector<48x128xf32> -> vector<48x128xf32>
    %180 = arith.addf %177, %179 : vector<48x128xf32>
    %181 = arith.truncf %175 : vector<48x128xf32> to vector<48x128xbf16>
    %c440 = arith.constant 440 : index
    %c0_40 = arith.constant 0 : index
    %182 = vector.load %arg3[%c440, %c0_40] : memref<704x128xbf16, #tpu.memory_space<vmem>>, vector<128x128xbf16>
    %cst_41 = arith.constant dense<0.000000e+00> : vector<48x128xf32>
    %183 = tpu.matmul %181, %182, %cst_41 {dimension_numbers = #tpu.dot_dimension_numbers<[1], [0], [0], [1], [0, 0, 1, 1], [], []>} : vector<48x128xbf16>, vector<128x128xbf16>, vector<48x128xf32> -> vector<48x128xf32>
    %184 = arith.addf %180, %183 : vector<48x128xf32>
    %185 = arith.truncf %184 : vector<48x128xf32> to vector<48x128xbf16>
    %c568 = arith.constant 568 : index
    %c0_42 = arith.constant 0 : index
    %186 = vector.load %arg3[%c568, %c0_42] : memref<704x128xbf16, #tpu.memory_space<vmem>>, vector<128x128xbf16>
    %cst_43 = arith.constant dense<0.000000e+00> : vector<48x128xf32>
    %187 = tpu.matmul %185, %186, %cst_43 {dimension_numbers = #tpu.dot_dimension_numbers<[1], [0], [0], [1], [0, 0, 1, 1], [], []>} : vector<48x128xbf16>, vector<128x128xbf16>, vector<48x128xf32> -> vector<48x128xf32>
    %188 = vector.extract_strided_slice %187 {offsets = [0, 0], sizes = [48, 32], strides = [1, 1]} : vector<48x128xf32> to vector<48x32xf32>
    %189 = vector.extract_strided_slice %187 {offsets = [0, 32], sizes = [48, 32], strides = [1, 1]} : vector<48x128xf32> to vector<48x32xf32>
    %cst_44 = arith.constant 1.11111116 : f32
    %190 = vector.broadcast %cst_44 : f32 to vector<48x32xf32>
    %191 = arith.mulf %189, %190 : vector<48x32xf32>
    %192 = arith.negf %191 : vector<48x32xf32>
    %193 = math.exp %192 : vector<48x32xf32>
    %cst_45 = arith.constant 1.000000e+00 : f32
    %194 = vector.broadcast %cst_45 : f32 to vector<48x32xf32>
    %195 = arith.addf %194, %193 : vector<48x32xf32>
    %196 = arith.divf %194, %195 : vector<48x32xf32>
    %cst_46 = arith.constant 0.899999976 : f32
    %197 = vector.broadcast %cst_46 : f32 to vector<48x32xf32>
    %198 = arith.mulf %197, %196 : vector<48x32xf32>
    %cst_47 = arith.constant 1.000000e-01 : f32
    %199 = vector.broadcast %cst_47 : f32 to vector<48x32xf32>
    %200 = arith.addf %198, %199 : vector<48x32xf32>
    %201 = vector.extract_strided_slice %172 {offsets = [0, 40], sizes = [48, 32], strides = [1, 1]} : vector<48x80xf32> to vector<48x32xf32>
    %202 = arith.mulf %201, %200 : vector<48x32xf32>
    %203 = arith.addf %188, %202 : vector<48x32xf32>
    %204 = vector.extract_strided_slice %170 {offsets = [0, 0], sizes = [48, 32], strides = [1, 1]} : vector<48x128xf32> to vector<48x32xf32>
    %c0_48 = arith.constant 0 : index
    %c0_49 = arith.constant 0 : index
    %205 = vector.load %arg4[%c0_48, %c0_49] : memref<48x128xf32, #tpu.memory_space<vmem>>, vector<48x32xf32>
    tpu.vector_store %arg4[%c0_48, %c0_49], %204 {strides = array<i32>} : memref<48x128xf32, #tpu.memory_space<vmem>>, vector<48x32xf32>,
    %c0_50 = arith.constant 0 : index
    %c32 = arith.constant 32 : index
    %206 = vector.load %arg4[%c0_50, %c32] : memref<48x128xf32, #tpu.memory_space<vmem>>, vector<48x32xf32>
    tpu.vector_store %arg4[%c0_50, %c32], %188 {strides = array<i32>} : memref<48x128xf32, #tpu.memory_space<vmem>>, vector<48x32xf32>,
    %c0_51 = arith.constant 0 : index
    %c64 = arith.constant 64 : index
    %207 = vector.load %arg4[%c0_51, %c64] : memref<48x128xf32, #tpu.memory_space<vmem>>, vector<48x32xf32>
    tpu.vector_store %arg4[%c0_51, %c64], %200 {strides = array<i32>} : memref<48x128xf32, #tpu.memory_space<vmem>>, vector<48x32xf32>,
    %c0_52 = arith.constant 0 : index
    %c96 = arith.constant 96 : index
    %208 = vector.load %arg4[%c0_52, %c96] : memref<48x128xf32, #tpu.memory_space<vmem>>, vector<48x32xf32>
    tpu.vector_store %arg4[%c0_52, %c96], %203 {strides = array<i32>} : memref<48x128xf32, #tpu.memory_space<vmem>>, vector<48x32xf32>,
    return
  }
}

</mosaic_0001>

<llo_original>
// kernel: tpu_custom_call.1
$region0: #{tpu_custom_call.1}
  #allocation0 [shape = 'u32[]', space=smem, size = 0x4, offset = 0x4, fixed_abs, tag = 'smem constant byte address 0x4 - core index']
  #allocation1 [shape = 'u32[144,128]{1,0:T(1,128)}', space=vmem, size = 0x12000, scoped, tag = 'internal scratch']
  %s0 = inlined_call_operand.hbm [shape: f32[8,152], index: 0, kind: input, shape index: {}]
  %s1 = inlined_call_operand.hbm [shape: f32[48,80], index: 1, kind: input, shape index: {}]
  %s2 = inlined_call_operand.hbm [shape: bf16[256,384], index: 2, kind: input, shape index: {}]
  %s3 = inlined_call_operand.hbm [shape: bf16[704,128], index: 3, kind: input, shape index: {}]
  %s4 = inlined_call_operand.hbm [shape: f32[48,128], index: 4, kind: output, shape index: {}]
  %s5 = sld [smem:[#allocation0]]
  $region42: #{tpu_custom_call.1} parent=0
    _
  %s7 = ssub.s32 1, %s5
  %s8 = scalar_select 0, %s7, %s5
  $region1: #{tpu_custom_call.1} parent=0
    #allocation2 [shape = 'u8[8192]{0}', space=vmem, size = 0x2000, scoped, tag = 'input window, operand 0, single buffered']
    #allocation3 [shape = 's32[1]{0}', space=sflag, size = 0x4, scoped, tag = 'scoped memory for tpu_custom_call.1']
    #allocation4 [shape = 's32[1]{0}', space=sflag, size = 0x4, scoped, tag = 'scoped memory for tpu_custom_call.1']
    #allocation5 [shape = 'u8[24576]{0}', space=vmem, size = 0x6000, scoped, tag = 'input window, operand 1, single buffered']
    #allocation6 [shape = 's32[1]{0}', space=sflag, size = 0x4, scoped, tag = 'scoped memory for tpu_custom_call.1']
    #allocation7 [shape = 'u8[196608]{0}', space=vmem, size = 0x30000, scoped, tag = 'input window, operand 2, single buffered']
    #allocation8 [shape = 'u8[180224]{0}', space=vmem, size = 0x2c000, scoped, tag = 'input window, operand 3, single buffered']
    #allocation9 [shape = 's32[1]{0}', space=sflag, size = 0x4, scoped, tag = 'scoped memory for tpu_custom_call.1']
    #allocation10 [shape = 'u8[24576]{0}', space=vmem, size = 0x6000, scoped, tag = 'output window, operand 0, single buffered']
    %9 = vsyncpa [#allocation3], 0
    %10 = vsyncpa [#allocation6], 0
    %11 = vsyncpa [#allocation9], 0
    %12 = vsyncpa [#allocation4], 0
    // Predicated region
    $region2: #{tpu_custom_call.1} parent=1 // pred_check
      _
    $region3: #{tpu_custom_call.1} parent=1 // pred_check_branch
      %14 = sbr.rel (0) target = $region5
    $region4: #{tpu_custom_call.1} parent=1 // pred_region
      %s16 = ssub.s32 256, 256
      %17 = vsyncadd [#allocation3], %s16
      %s19 = sshll.u32 [#allocation2], 4
      %s20 = int_to_ptr.vmem [resolvable:$true] %s19
      %22 = dma.hbm_to_vmem [thread:$0]  %s0, 256, %s20, [#allocation3]
    $region5: #{tpu_custom_call.1} parent=1 // pred_fallthru
      _
    // Predicated region
    $region6: #{tpu_custom_call.1} parent=1 // pred_check
      _
    $region7: #{tpu_custom_call.1} parent=1 // pred_check_branch
      %24 = sbr.rel (0) target = $region9
    $region8: #{tpu_custom_call.1} parent=1 // pred_region
      %s26 = ssub.s32 768, 768
      %27 = vsyncadd [#allocation6], %s26
      %s28 = sshll.u32 [#allocation5], 4
      %s29 = int_to_ptr.vmem [resolvable:$true] %s28
      %34 = dma.hbm_to_vmem [thread:$0]  %s1, 768, %s29, [#allocation6], 128, 128, 8
    $region9: #{tpu_custom_call.1} parent=1 // pred_fallthru
      _
    // Predicated region
    $region10: #{tpu_custom_call.1} parent=1 // pred_check
      _
    $region11: #{tpu_custom_call.1} parent=1 // pred_check_branch
      %36 = sbr.rel (0) target = $region13
    $region12: #{tpu_custom_call.1} parent=1 // pred_region
      %s38 = ssub.s32 6144, 6144
      %39 = vsyncadd [#allocation6], %s38
      %s40 = sshll.u32 [#allocation7], 4
      %s41 = int_to_ptr.vmem [resolvable:$true] %s40
      %46 = dma.hbm_to_vmem [thread:$0]  %s2, 6144, %s41, [#allocation6], 192, 192, 12
    $region13: #{tpu_custom_call.1} parent=1 // pred_fallthru
      _
    // Predicated region
    $region14: #{tpu_custom_call.1} parent=1 // pred_check
      _
    $region15: #{tpu_custom_call.1} parent=1 // pred_check_branch
      %48 = sbr.rel (0) target = $region17
    $region16: #{tpu_custom_call.1} parent=1 // pred_region
      %s50 = ssub.s32 5632, 5632
      %51 = vsyncadd [#allocation9], %s50
      %s52 = sshll.u32 [#allocation8], 4
      %s53 = int_to_ptr.vmem [resolvable:$true] %s52
      %58 = dma.hbm_to_vmem [thread:$0]  %s3, 5632, %s53, [#allocation9], 64, 64, 4
    $region17: #{tpu_custom_call.1} parent=1 // pred_fallthru
      _
    // Predicated region
    $region18: #{tpu_custom_call.1} parent=1 // pred_check
      _
    $region19: #{tpu_custom_call.1} parent=1 // pred_check_branch
      %60 = sbr.rel (0) target = $region21
    $region20: #{tpu_custom_call.1} parent=1 // pred_region
      %61 = dma.done [#allocation3], 256
    $region21: #{tpu_custom_call.1} parent=1 // pred_fallthru
      _
    // Predicated region
    $region22: #{tpu_custom_call.1} parent=1 // pred_check
      _
    $region23: #{tpu_custom_call.1} parent=1 // pred_check_branch
      %63 = sbr.rel (0) target = $region25
    $region24: #{tpu_custom_call.1} parent=1 // pred_region
      %64 = dma.done [#allocation6], 768
    $region25: #{tpu_custom_call.1} parent=1 // pred_fallthru
      _
    // Predicated region
    $region26: #{tpu_custom_call.1} parent=1 // pred_check
      _
    $region27: #{tpu_custom_call.1} parent=1 // pred_check_branch
      %66 = sbr.rel (0) target = $region29
    $region28: #{tpu_custom_call.1} parent=1 // pred_region
      %67 = dma.done [#allocation6], 6144
    $region29: #{tpu_custom_call.1} parent=1 // pred_fallthru
      _
    // Predicated region
    $region30: #{tpu_custom_call.1} parent=1 // pred_check
      _
    $region31: #{tpu_custom_call.1} parent=1 // pred_check_branch
      %69 = sbr.rel (0) target = $region33
    $region32: #{tpu_custom_call.1} parent=1 // pred_region
      %70 = dma.done [#allocation9], 5632
    $region33: #{tpu_custom_call.1} parent=1 // pred_fallthru
      _
    %v72 = vld [vmem:[#allocation2] sm:$0xff]
    %v73 = vld [vmem:[#allocation2 + $0x8] sm:$0xff]
    %v74 = vpack.c.bf16 %v72, %v72
    %v75 = vpack.c.bf16 %v73, %v73
    %v76 = vld [vmem:[#allocation8] sm:$0xf]
    %v77 = vld [vmem:[#allocation8 + $0x4] sm:$0xf]
    %v78 = vld [vmem:[#allocation8 + $0x8] sm:$0xf]
    %v79 = vld [vmem:[#allocation8 + $0xc] sm:$0xf]
    %v80 = vld [vmem:[#allocation8 + $0x10] sm:$0xf]
    %v81 = vld [vmem:[#allocation8 + $0x14] sm:$0xf]
    %v82 = vld [vmem:[#allocation8 + $0x18] sm:$0xf]
    %v83 = vld [vmem:[#allocation8 + $0x1c] sm:$0xf]
    %v84 = vld [vmem:[#allocation8 + $0x20] sm:$0xf]
    %v85 = vld [vmem:[#allocation8 + $0x24] sm:$0xf]
    %v86 = vld [vmem:[#allocation8 + $0x28] sm:$0xf]
    %v87 = vld [vmem:[#allocation8 + $0x2c] sm:$0xf]
    %v88 = vld [vmem:[#allocation8 + $0x30] sm:$0xf]
    %v89 = vld [vmem:[#allocation8 + $0x34] sm:$0xf]
    %v90 = vld [vmem:[#allocation8 + $0x38] sm:$0xf]
    %v91 = vld [vmem:[#allocation8 + $0x3c] sm:$0xf]
    %v92 = vld [vmem:[#allocation8 + $0x40] sm:$0xf]
    %v93 = vld [vmem:[#allocation8 + $0x44] sm:$0xf]
    %v94 = vld [vmem:[#allocation8 + $0x48] sm:$0xf]
    %v114 = vunpack.c.l.b16 %v76
    %v115 = vunpack.c.l.b16 %v77
    %v116 = vunpack.c.l.b16 %v78
    %v117 = vunpack.c.l.b16 %v79
    %v118 = vunpack.c.l.b16 %v80
    %v119 = vunpack.c.l.b16 %v81
    %v120 = vunpack.c.l.b16 %v82
    %v121 = vunpack.c.l.b16 %v83
    %v122 = vunpack.c.l.b16 %v84
    %v123 = vunpack.c.l.b16 %v85
    %v124 = vunpack.c.l.b16 %v86
    %v125 = vunpack.c.l.b16 %v87
    %v126 = vunpack.c.l.b16 %v88
    %v127 = vunpack.c.l.b16 %v89
    %v128 = vunpack.c.l.b16 %v90
    %v129 = vunpack.c.l.b16 %v91
    %v130 = vunpack.c.l.b16 %v92
    %v131 = vunpack.c.l.b16 %v93
    %v132 = vunpack.c.l.b16 %v94
    %v133 = vpack.c.b16 %v115, %v114
    %v134 = vpack.c.b16 %v117, %v116
    %v135 = vpack.c.b16 %v119, %v118
    %v136 = vpack.c.b16 %v121, %v120
    %v137 = vpack.c.b16 %v123, %v122
    %v138 = vpack.c.b16 %v125, %v124
    %v139 = vpack.c.b16 %v127, %v126
    %v140 = vpack.c.b16 %v129, %v128
    %v141 = vpack.c.b16 %v131, %v130
    %v142 = vpack.c.b16 %v132, %v132
    %vm152 = vcmask 195584
    %v154 = vsel %vm152, %v75, 0
    %vm156 = vcmask 1043456
    %v158 = vsel %vm156, %v142, 0
    %160 = vmatprep.subr.bf16.mxu0 0
    %161 = vmatpush1.bf16.msra.mxu0 %v133
    %162 = vmatprep.subr.bf16.mxu0 0
    %163 = vmatpush1.bf16.msra.mxu0 %v134
    %164 = vmatprep.subr.bf16.mxu0 0
    %165 = vmatpush1.bf16.msra.mxu0 %v135
    %166 = vmatprep.subr.bf16.mxu0 0
    %167 = vmatpush1.bf16.msra.mxu0 %v136
    %168 = vmatprep.subr.bf16.mxu0 0
    %169 = vmatpush1.bf16.msra.mxu0 %v137
    %170 = vmatprep.subr.bf16.mxu0 0
    %171 = vmatpush1.bf16.msra.mxu0 %v138
    %172 = vmatprep.subr.bf16.mxu0 0
    %173 = vmatpush1.bf16.msra.mxu0 %v139
    %174 = vmatprep.subr.bf16.mxu0 0
    %175 = vmatpush1.bf16.msra.mxu0 %v140
    %176 = vmatprep.subr.bf16.mxu0 0
    %177 = vmatpush1.bf16.msra.mxu0 %v141
    %178 = vmatprep.subr.bf16.mxu0 0
    %179 = vmatpush1.bf16.msra.mxu0 %v158
    %180 = vmatprep.subr.bf16.mxu0 0
    %181 = vmatpush1.bf16.msra.mxu0 0
    %182 = vmatprep.subr.bf16.mxu0 0
    %183 = vmatpush1.bf16.msra.mxu0 0
    %184 = vmatprep.subr.bf16.mxu0 0
    %185 = vmatpush1.bf16.msra.mxu0 0
    %186 = vmatprep.subr.bf16.mxu0 0
    %187 = vmatpush1.bf16.msra.mxu0 0
    %188 = vmatprep.subr.bf16.mxu0 0
    %189 = vmatpush1.bf16.msra.mxu0 0
    %190 = vmatprep.subr.bf16.mxu0 0
    %191 = vmatpush1.bf16.msra.mxu0 0
    %192 = vmatprep.mubr.bf16.mxu0 %v154
    %193 = vmatmul.mubr.bf16.gmra.mrb[0].mxu0 %v74
    %v194 = vpop.f32.mrb[0].mxu0
    %v195 = vadd.f32 0.0, %v194
    %v196 = vpop.f32.mrb[0].mxu0
    %v197 = vpop.f32.mrb[0].mxu0
    %v198 = vpop.f32.mrb[0].mxu0
    %199 = vdwg.mxu0
    %v200 = vpack.c.bf16 %v195, %v195
    %v201 = vld [vmem:[#allocation7] sm:$0xff]
    %v202 = vld [vmem:[#allocation7 + $0x8] sm:$0xf]
    %v203 = vld [vmem:[#allocation7 + $0xc] sm:$0xff]
    %v204 = vld [vmem:[#allocation7 + $0x14] sm:$0xf]
    %v205 = vld [vmem:[#allocation7 + $0x18] sm:$0xff]
    %v206 = vld [vmem:[#allocation7 + $0x20] sm:$0xf]
    %v207 = vld [vmem:[#allocation7 + $0x24] sm:$0xff]
    %v208 = vld [vmem:[#allocation7 + $0x2c] sm:$0xf]
    %v209 = vld [vmem:[#allocation7 + $0x30] sm:$0xff]
    %v210 = vld [vmem:[#allocation7 + $0x38] sm:$0xf]
    %v211 = vld [vmem:[#allocation7 + $0x3c] sm:$0xff]
    %v212 = vld [vmem:[#allocation7 + $0x44] sm:$0xf]
    %v213 = vld [vmem:[#allocation7 + $0x48] sm:$0xff]
    %v214 = vld [vmem:[#allocation7 + $0x50] sm:$0xf]
    %v215 = vld [vmem:[#allocation7 + $0x54] sm:$0xff]
    %v216 = vld [vmem:[#allocation7 + $0x5c] sm:$0xf]
    %v217 = vld [vmem:[#allocation7 + $0x60] sm:$0xff]
    %v218 = vld [vmem:[#allocation7 + $0x68] sm:$0xf]
    %v219 = vld [vmem:[#allocation7 + $0x6c] sm:$0xff]
    %v220 = vld [vmem:[#allocation7 + $0x74] sm:$0xf]
    %v221 = vld [vmem:[#allocation7 + $0x78] sm:$0xff]
    %v222 = vld [vmem:[#allocation7 + $0x80] sm:$0xf]
    %v223 = vld [vmem:[#allocation7 + $0x84] sm:$0xff]
    %v224 = vld [vmem:[#allocation7 + $0x8c] sm:$0xf]
    %v225 = vld [vmem:[#allocation7 + $0x90] sm:$0xff]
    %v226 = vld [vmem:[#allocation7 + $0x98] sm:$0xf]
    %v227 = vld [vmem:[#allocation7 + $0x9c] sm:$0xff]
    %v228 = vld [vmem:[#allocation7 + $0xa4] sm:$0xf]
    %v229 = vld [vmem:[#allocation7 + $0xa8] sm:$0xff]
    %v230 = vld [vmem:[#allocation7 + $0xb0] sm:$0xf]
    %v231 = vld [vmem:[#allocation7 + $0xb4] sm:$0xff]
    %v232 = vld [vmem:[#allocation7 + $0xbc] sm:$0xf]
    %v265 = vunpack.c.l.b16 %v201
    %v266 = vunpack.c.h.b16 %v201
    %v267 = vunpack.c.l.b16 %v202
    %v268 = vunpack.c.l.b16 %v203
    %v269 = vunpack.c.h.b16 %v203
    %v270 = vunpack.c.l.b16 %v204
    %v271 = vunpack.c.l.b16 %v205
    %v272 = vunpack.c.h.b16 %v205
    %v273 = vunpack.c.l.b16 %v206
    %v274 = vunpack.c.l.b16 %v207
    %v275 = vunpack.c.h.b16 %v207
    %v276 = vunpack.c.l.b16 %v208
    %v277 = vunpack.c.l.b16 %v209
    %v278 = vunpack.c.h.b16 %v209
    %v279 = vunpack.c.l.b16 %v210
    %v280 = vunpack.c.l.b16 %v211
    %v281 = vunpack.c.h.b16 %v211
    %v282 = vunpack.c.l.b16 %v212
    %v283 = vunpack.c.l.b16 %v213
    %v284 = vunpack.c.h.b16 %v213
    %v285 = vunpack.c.l.b16 %v214
    %v286 = vunpack.c.l.b16 %v215
    %v287 = vunpack.c.h.b16 %v215
    %v288 = vunpack.c.l.b16 %v216
    %v289 = vunpack.c.l.b16 %v217
    %v290 = vunpack.c.h.b16 %v217
    %v291 = vunpack.c.l.b16 %v218
    %v292 = vunpack.c.l.b16 %v219
    %v293 = vunpack.c.h.b16 %v219
    %v294 = vunpack.c.l.b16 %v220
    %v295 = vunpack.c.l.b16 %v221
    %v296 = vunpack.c.h.b16 %v221
    %v297 = vunpack.c.l.b16 %v222
    %v298 = vunpack.c.l.b16 %v223
    %v299 = vunpack.c.h.b16 %v223
    %v300 = vunpack.c.l.b16 %v224
    %v301 = vunpack.c.l.b16 %v225
    %v302 = vunpack.c.h.b16 %v225
    %v303 = vunpack.c.l.b16 %v226
    %v304 = vunpack.c.l.b16 %v227
    %v305 = vunpack.c.h.b16 %v227
    %v306 = vunpack.c.l.b16 %v228
    %v307 = vunpack.c.l.b16 %v229
    %v308 = vunpack.c.h.b16 %v229
    %v309 = vunpack.c.l.b16 %v230
    %v310 = vunpack.c.l.b16 %v231
    %v311 = vunpack.c.h.b16 %v231
    %v312 = vunpack.c.l.b16 %v232
    %v313 = vpack.c.b16 %v268, %v265
    %v314 = vpack.c.b16 %v269, %v266
    %v315 = vpack.c.b16 %v270, %v267
    %v316 = vpack.c.b16 %v274, %v271
    %v317 = vpack.c.b16 %v275, %v272
    %v318 = vpack.c.b16 %v276, %v273
    %v319 = vpack.c.b16 %v280, %v277
    %v320 = vpack.c.b16 %v281, %v278
    %v321 = vpack.c.b16 %v282, %v279
    %v322 = vpack.c.b16 %v286, %v283
    %v323 = vpack.c.b16 %v287, %v284
    %v324 = vpack.c.b16 %v288, %v285
    %v325 = vpack.c.b16 %v292, %v289
    %v326 = vpack.c.b16 %v293, %v290
    %v327 = vpack.c.b16 %v294, %v291
    %v328 = vpack.c.b16 %v298, %v295
    %v329 = vpack.c.b16 %v299, %v296
    %v330 = vpack.c.b16 %v300, %v297
    %v331 = vpack.c.b16 %v304, %v301
    %v332 = vpack.c.b16 %v305, %v302
    %v333 = vpack.c.b16 %v306, %v303
    %v334 = vpack.c.b16 %v310, %v307
    %v335 = vpack.c.b16 %v311, %v308
    %v336 = vpack.c.b16 %v312, %v309
    %361 = vmatprep.subr.bf16.mxu0 %v314
    %362 = vmatpush1.bf16.msra.mxu0 %v313
    %363 = vmatprep.subr.bf16.mxu0 %v317
    %364 = vmatpush1.bf16.msra.mxu0 %v316
    %365 = vmatprep.subr.bf16.mxu0 %v320
    %366 = vmatpush1.bf16.msra.mxu0 %v319
    %367 = vmatprep.subr.bf16.mxu0 %v323
    %368 = vmatpush1.bf16.msra.mxu0 %v322
    %369 = vmatprep.subr.bf16.mxu0 %v326
    %370 = vmatpush1.bf16.msra.mxu0 %v325
    %371 = vmatprep.subr.bf16.mxu0 %v329
    %372 = vmatpush1.bf16.msra.mxu0 %v328
    %373 = vmatprep.subr.bf16.mxu0 %v332
    %374 = vmatpush1.bf16.msra.mxu0 %v331
    %375 = vmatprep.subr.bf16.mxu0 %v335
    %376 = vmatpush1.bf16.msra.mxu0 %v334
    %377 = vmatprep.subr.bf16.mxu0 0
    %378 = vmatpush1.bf16.msra.mxu0 0
    %379 = vmatprep.subr.bf16.mxu0 0
    %380 = vmatpush1.bf16.msra.mxu0 0
    %381 = vmatprep.subr.bf16.mxu0 0
    %382 = vmatpush1.bf16.msra.mxu0 0
    %383 = vmatprep.subr.bf16.mxu0 0
    %384 = vmatpush1.bf16.msra.mxu0 0
    %385 = vmatprep.subr.bf16.mxu0 0
    %386 = vmatpush1.bf16.msra.mxu0 0
    %387 = vmatprep.subr.bf16.mxu0 0
    %388 = vmatpush1.bf16.msra.mxu0 0
    %389 = vmatprep.subr.bf16.mxu0 0
    %390 = vmatpush1.bf16.msra.mxu0 0
    %391 = vmatprep.subr.bf16.mxu0 0
    %392 = vmatpush1.bf16.msra.mxu0 0
    %393 = vmatprep.mubr.bf16.mxu0 0
    %394 = vmatmul.mubr.bf16.gmra.mrb[0].mxu0 %v200
    %v395 = vpop.f32.mrb[0].mxu0
    %v396 = vadd.f32 0.0, %v395
    %v397 = vpop.f32.mrb[0].mxu0
    %v398 = vadd.f32 0.0, %v397
    %v399 = vpop.f32.mrb[0].mxu0
    %v400 = vpop.f32.mrb[0].mxu0
    %401 = vdwg.mxu0
    %402 = vmatprep.subr.bf16.mxu0 0
    %403 = vmatpush1.bf16.msra.mxu0 %v315
    %404 = vmatprep.subr.bf16.mxu0 0
    %405 = vmatpush1.bf16.msra.mxu0 %v318
    %406 = vmatprep.subr.bf16.mxu0 0
    %407 = vmatpush1.bf16.msra.mxu0 %v321
    %408 = vmatprep.subr.bf16.mxu0 0
    %409 = vmatpush1.bf16.msra.mxu0 %v324
    %410 = vmatprep.subr.bf16.mxu0 0
    %411 = vmatpush1.bf16.msra.mxu0 %v327
    %412 = vmatprep.subr.bf16.mxu0 0
    %413 = vmatpush1.bf16.msra.mxu0 %v330
    %414 = vmatprep.subr.bf16.mxu0 0
    %415 = vmatpush1.bf16.msra.mxu0 %v333
    %416 = vmatprep.subr.bf16.mxu0 0
    %417 = vmatpush1.bf16.msra.mxu0 %v336
    %418 = vmatprep.subr.bf16.mxu0 0
    %419 = vmatpush1.bf16.msra.mxu0 0
    %420 = vmatprep.subr.bf16.mxu0 0
    %421 = vmatpush1.bf16.msra.mxu0 0
    %422 = vmatprep.subr.bf16.mxu0 0
    %423 = vmatpush1.bf16.msra.mxu0 0
    %424 = vmatprep.subr.bf16.mxu0 0
    %425 = vmatpush1.bf16.msra.mxu0 0
    %426 = vmatprep.subr.bf16.mxu0 0
    %427 = vmatpush1.bf16.msra.mxu0 0
    %428 = vmatprep.subr.bf16.mxu0 0
    %429 = vmatpush1.bf16.msra.mxu0 0
    %430 = vmatprep.subr.bf16.mxu0 0
    %431 = vmatpush1.bf16.msra.mxu0 0
    %432 = vmatprep.subr.bf16.mxu0 0
    %433 = vmatpush1.bf16.msra.mxu0 0
    %434 = vmatprep.mubr.bf16.mxu0 0
    %435 = vmatmul.mubr.bf16.gmra.mrb[0].mxu0 %v200
    %v436 = vpop.f32.mrb[0].mxu0
    %v437 = vadd.f32 0.0, %v436
    %v438 = vpop.f32.mrb[0].mxu0
    %v439 = vpop.f32.mrb[0].mxu0
    %v440 = vpop.f32.mrb[0].mxu0
    %441 = vdwg.mxu0
    %v442 = vld [vmem:[#allocation7 + $0xc0] sm:$0xff]
    %v443 = vld [vmem:[#allocation7 + $0xc8] sm:$0xf]
    %v444 = vld [vmem:[#allocation7 + $0xcc] sm:$0xff]
    %v445 = vld [vmem:[#allocation7 + $0xd4] sm:$0xf]
    %v446 = vld [vmem:[#allocation7 + $0xd8] sm:$0xff]
    %v447 = vld [vmem:[#allocation7 + $0xe0] sm:$0xf]
    %v448 = vld [vmem:[#allocation7 + $0xe4] sm:$0xff]
    %v449 = vld [vmem:[#allocation7 + $0xec] sm:$0xf]
    %v450 = vld [vmem:[#allocation7 + $0xf0] sm:$0xff]
    %v451 = vld [vmem:[#allocation7 + $0xf8] sm:$0xf]
    %v452 = vld [vmem:[#allocation7 + $0xfc] sm:$0xff]
    %v453 = vld [vmem:[#allocation7 + $0x104] sm:$0xf]
    %v454 = vld [vmem:[#allocation7 + $0x108] sm:$0xff]
    %v455 = vld [vmem:[#allocation7 + $0x110] sm:$0xf]
    %v456 = vld [vmem:[#allocation7 + $0x114] sm:$0xff]
    %v457 = vld [vmem:[#allocation7 + $0x11c] sm:$0xf]
    %v458 = vld [vmem:[#allocation7 + $0x120] sm:$0xff]
    %v459 = vld [vmem:[#allocation7 + $0x128] sm:$0xf]
    %v460 = vld [vmem:[#allocation7 + $0x12c] sm:$0xff]
    %v461 = vld [vmem:[#allocation7 + $0x134] sm:$0xf]
    %v462 = vld [vmem:[#allocation7 + $0x138] sm:$0xff]
    %v463 = vld [vmem:[#allocation7 + $0x140] sm:$0xf]
    %v464 = vld [vmem:[#allocation7 + $0x144] sm:$0xff]
    %v465 = vld [vmem:[#allocation7 + $0x14c] sm:$0xf]
    %v466 = vld [vmem:[#allocation7 + $0x150] sm:$0xff]
    %v467 = vld [vmem:[#allocation7 + $0x158] sm:$0xf]
    %v468 = vld [vmem:[#allocation7 + $0x15c] sm:$0xff]
    %v469 = vld [vmem:[#allocation7 + $0x164] sm:$0xf]
    %v470 = vld [vmem:[#allocation7 + $0x168] sm:$0xff]
    %v471 = vld [vmem:[#allocation7 + $0x170] sm:$0xf]
    %v472 = vld [vmem:[#allocation7 + $0x174] sm:$0xff]
    %v473 = vld [vmem:[#allocation7 + $0x17c] sm:$0xf]
    %v474 = vld [vmem:[#allocation8 + $0x15c] sm:$0xf]
    %v475 = vunpack.c.l.bf16 %v474
    %v508 = vunpack.c.l.b16 %v442
    %v509 = vunpack.c.h.b16 %v442
    %v510 = vunpack.c.l.b16 %v443
    %v511 = vunpack.c.l.b16 %v444
    %v512 = vunpack.c.h.b16 %v444
    %v513 = vunpack.c.l.b16 %v445
    %v514 = vunpack.c.l.b16 %v446
    %v515 = vunpack.c.h.b16 %v446
    %v516 = vunpack.c.l.b16 %v447
    %v517 = vunpack.c.l.b16 %v448
    %v518 = vunpack.c.h.b16 %v448
    %v519 = vunpack.c.l.b16 %v449
    %v520 = vunpack.c.l.b16 %v450
    %v521 = vunpack.c.h.b16 %v450
    %v522 = vunpack.c.l.b16 %v451
    %v523 = vunpack.c.l.b16 %v452
    %v524 = vunpack.c.h.b16 %v452
    %v525 = vunpack.c.l.b16 %v453
    %v526 = vunpack.c.l.b16 %v454
    %v527 = vunpack.c.h.b16 %v454
    %v528 = vunpack.c.l.b16 %v455
    %v529 = vunpack.c.l.b16 %v456
    %v530 = vunpack.c.h.b16 %v456
    %v531 = vunpack.c.l.b16 %v457
    %v532 = vunpack.c.l.b16 %v458
    %v533 = vunpack.c.h.b16 %v458
    %v534 = vunpack.c.l.b16 %v459
    %v535 = vunpack.c.l.b16 %v460
    %v536 = vunpack.c.h.b16 %v460
    %v537 = vunpack.c.l.b16 %v461
    %v538 = vunpack.c.l.b16 %v462
    %v539 = vunpack.c.h.b16 %v462
    %v540 = vunpack.c.l.b16 %v463
    %v541 = vunpack.c.l.b16 %v464
    %v542 = vunpack.c.h.b16 %v464
    %v543 = vunpack.c.l.b16 %v465
    %v544 = vunpack.c.l.b16 %v466
    %v545 = vunpack.c.h.b16 %v466
    %v546 = vunpack.c.l.b16 %v467
    %v547 = vunpack.c.l.b16 %v468
    %v548 = vunpack.c.h.b16 %v468
    %v549 = vunpack.c.l.b16 %v469
    %v550 = vunpack.c.l.b16 %v470
    %v551 = vunpack.c.h.b16 %v470
    %v552 = vunpack.c.l.b16 %v471
    %v553 = vunpack.c.l.b16 %v472
    %v554 = vunpack.c.h.b16 %v472
    %v555 = vunpack.c.l.b16 %v473
    %v556 = vpack.c.b16 %v511, %v508
    %v557 = vpack.c.b16 %v512, %v509
    %v558 = vpack.c.b16 %v513, %v510
    %v559 = vpack.c.b16 %v517, %v514
    %v560 = vpack.c.b16 %v518, %v515
    %v561 = vpack.c.b16 %v519, %v516
    %v562 = vpack.c.b16 %v523, %v520
    %v563 = vpack.c.b16 %v524, %v521
    %v564 = vpack.c.b16 %v525, %v522
    %v565 = vpack.c.b16 %v529, %v526
    %v566 = vpack.c.b16 %v530, %v527
    %v567 = vpack.c.b16 %v531, %v528
    %v568 = vpack.c.b16 %v535, %v532
    %v569 = vpack.c.b16 %v536, %v533
    %v570 = vpack.c.b16 %v537, %v534
    %v571 = vpack.c.b16 %v541, %v538
    %v572 = vpack.c.b16 %v542, %v539
    %v573 = vpack.c.b16 %v543, %v540
    %v574 = vpack.c.b16 %v547, %v544
    %v575 = vpack.c.b16 %v548, %v545
    %v576 = vpack.c.b16 %v549, %v546
    %v577 = vpack.c.b16 %v553, %v550
    %v578 = vpack.c.b16 %v554, %v551
    %v579 = vpack.c.b16 %v555, %v552
    %604 = vmatprep.subr.bf16.mxu0 %v557
    %605 = vmatpush1.bf16.msra.mxu0 %v556
    %606 = vmatprep.subr.bf16.mxu0 %v560
    %607 = vmatpush1.bf16.msra.mxu0 %v559
    %608 = vmatprep.subr.bf16.mxu0 %v563
    %609 = vmatpush1.bf16.msra.mxu0 %v562
    %610 = vmatprep.subr.bf16.mxu0 %v566
    %611 = vmatpush1.bf16.msra.mxu0 %v565
    %612 = vmatprep.subr.bf16.mxu0 %v569
    %613 = vmatpush1.bf16.msra.mxu0 %v568
    %614 = vmatprep.subr.bf16.mxu0 %v572
    %615 = vmatpush1.bf16.msra.mxu0 %v571
    %616 = vmatprep.subr.bf16.mxu0 %v575
    %617 = vmatpush1.bf16.msra.mxu0 %v574
    %618 = vmatprep.subr.bf16.mxu0 %v578
    %619 = vmatpush1.bf16.msra.mxu0 %v577
    %620 = vmatprep.subr.bf16.mxu0 0
    %621 = vmatpush1.bf16.msra.mxu0 0
    %622 = vmatprep.subr.bf16.mxu0 0
    %623 = vmatpush1.bf16.msra.mxu0 0
    %624 = vmatprep.subr.bf16.mxu0 0
    %625 = vmatpush1.bf16.msra.mxu0 0
    %626 = vmatprep.subr.bf16.mxu0 0
    %627 = vmatpush1.bf16.msra.mxu0 0
    %628 = vmatprep.subr.bf16.mxu0 0
    %629 = vmatpush1.bf16.msra.mxu0 0
    %630 = vmatprep.subr.bf16.mxu0 0
    %631 = vmatpush1.bf16.msra.mxu0 0
    %632 = vmatprep.subr.bf16.mxu0 0
    %633 = vmatpush1.bf16.msra.mxu0 0
    %634 = vmatprep.subr.bf16.mxu0 0
    %635 = vmatpush1.bf16.msra.mxu0 0
    %636 = vmatprep.mubr.bf16.mxu0 0
    %637 = vmatmul.mubr.bf16.gmra.mrb[0].mxu0 %v74
    %v638 = vpop.f32.mrb[0].mxu0
    %v639 = vadd.f32 0.0, %v638
    %v640 = vpop.f32.mrb[0].mxu0
    %v641 = vadd.f32 0.0, %v640
    %v642 = vpop.f32.mrb[0].mxu0
    %v643 = vpop.f32.mrb[0].mxu0
    %644 = vdwg.mxu0
    %645 = vmatprep.subr.bf16.mxu0 0
    %646 = vmatpush1.bf16.msra.mxu0 %v558
    %647 = vmatprep.subr.bf16.mxu0 0
    %648 = vmatpush1.bf16.msra.mxu0 %v561
    %649 = vmatprep.subr.bf16.mxu0 0
    %650 = vmatpush1.bf16.msra.mxu0 %v564
    %651 = vmatprep.subr.bf16.mxu0 0
    %652 = vmatpush1.bf16.msra.mxu0 %v567
    %653 = vmatprep.subr.bf16.mxu0 0
    %654 = vmatpush1.bf16.msra.mxu0 %v570
    %655 = vmatprep.subr.bf16.mxu0 0
    %656 = vmatpush1.bf16.msra.mxu0 %v573
    %657 = vmatprep.subr.bf16.mxu0 0
    %658 = vmatpush1.bf16.msra.mxu0 %v576
    %659 = vmatprep.subr.bf16.mxu0 0
    %660 = vmatpush1.bf16.msra.mxu0 %v579
    %661 = vmatprep.subr.bf16.mxu0 0
    %662 = vmatpush1.bf16.msra.mxu0 0
    %663 = vmatprep.subr.bf16.mxu0 0
    %664 = vmatpush1.bf16.msra.mxu0 0
    %665 = vmatprep.subr.bf16.mxu0 0
    %666 = vmatpush1.bf16.msra.mxu0 0
    %667 = vmatprep.subr.bf16.mxu0 0
    %668 = vmatpush1.bf16.msra.mxu0 0
    %669 = vmatprep.subr.bf16.mxu0 0
    %670 = vmatpush1.bf16.msra.mxu0 0
    %671 = vmatprep.subr.bf16.mxu0 0
    %672 = vmatpush1.bf16.msra.mxu0 0
    %673 = vmatprep.subr.bf16.mxu0 0
    %674 = vmatpush1.bf16.msra.mxu0 0
    %675 = vmatprep.subr.bf16.mxu0 0
    %676 = vmatpush1.bf16.msra.mxu0 0
    %677 = vmatprep.mubr.bf16.mxu0 0
    %678 = vmatmul.mubr.bf16.gmra.mrb[0].mxu0 %v74
    %v679 = vpop.f32.mrb[0].mxu0
    %v680 = vadd.f32 0.0, %v679
    %v681 = vpop.f32.mrb[0].mxu0
    %v682 = vpop.f32.mrb[0].mxu0
    %v683 = vpop.f32.mrb[0].mxu0
    %684 = vdwg.mxu0
    %v685 = vadd.f32 %v396, %v639
    %v686 = vxor.u32 %v685, 2147483648
    %v687 = vmul.f32 %v686, 1.442695
    %v688 = vpow.pop %v687
    %v689 = vadd.f32 %v688, 1.0
    %v690 = vrcp.pop %v689
    %v691 = vmul.f32 1.0, %v690
    %v692 = vadd.f32 %v398, %v641
    %v693 = vxor.u32 %v692, 2147483648
    %v694 = vmul.f32 %v693, 1.442695
    %v695 = vpow.pop %v694
    %v696 = vadd.f32 %v695, 1.0
    %v697 = vrcp.pop %v696
    %v698 = vmul.f32 1.0, %v697
    %v699 = vadd.f32 %v680, %v475
    %v700 = vmul.f32 %v691, %v699
    %v701 = vadd.f32 %v437, %v700
    %v702 = vtanh.pop %v701
    %v703 = vsub.f32 1.0, %v698
    %v704 = vmul.f32 %v703, %v702
    %v705 = vmul.f32 %v698, %v72
    %v706 = vadd.f32 %v704, %v705
    %v707 = vpack.c.bf16 %v706, %v706
    %708 = vmatprep.subr.bf16.mxu0 %v557
    %709 = vmatpush1.bf16.msra.mxu0 %v556
    %710 = vmatprep.subr.bf16.mxu0 %v560
    %711 = vmatpush1.bf16.msra.mxu0 %v559
    %712 = vmatprep.subr.bf16.mxu0 %v563
    %713 = vmatpush1.bf16.msra.mxu0 %v562
    %714 = vmatprep.subr.bf16.mxu0 %v566
    %715 = vmatpush1.bf16.msra.mxu0 %v565
    %716 = vmatprep.subr.bf16.mxu0 %v569
    %717 = vmatpush1.bf16.msra.mxu0 %v568
    %718 = vmatprep.subr.bf16.mxu0 %v572
    %719 = vmatpush1.bf16.msra.mxu0 %v571
    %720 = vmatprep.subr.bf16.mxu0 %v575
    %721 = vmatpush1.bf16.msra.mxu0 %v574
    %722 = vmatprep.subr.bf16.mxu0 %v578
    %723 = vmatpush1.bf16.msra.mxu0 %v577
    %724 = vmatprep.subr.bf16.mxu0 0
    %725 = vmatpush1.bf16.msra.mxu0 0
    %726 = vmatprep.subr.bf16.mxu0 0
    %727 = vmatpush1.bf16.msra.mxu0 0
    %728 = vmatprep.subr.bf16.mxu0 0
    %729 = vmatpush1.bf16.msra.mxu0 0
    %730 = vmatprep.subr.bf16.mxu0 0
    %731 = vmatpush1.bf16.msra.mxu0 0
    %732 = vmatprep.subr.bf16.mxu0 0
    %733 = vmatpush1.bf16.msra.mxu0 0
    %734 = vmatprep.subr.bf16.mxu0 0
    %735 = vmatpush1.bf16.msra.mxu0 0
    %736 = vmatprep.subr.bf16.mxu0 0
    %737 = vmatpush1.bf16.msra.mxu0 0
    %738 = vmatprep.subr.bf16.mxu0 0
    %739 = vmatpush1.bf16.msra.mxu0 0
    %740 = vmatprep.mubr.bf16.mxu0 0
    %741 = vmatmul.mubr.bf16.gmra.mrb[0].mxu0 %v707
    %v742 = vpop.f32.mrb[0].mxu0
    %v743 = vadd.f32 0.0, %v742
    %v744 = vpop.f32.mrb[0].mxu0
    %v745 = vadd.f32 0.0, %v744
    %v746 = vpop.f32.mrb[0].mxu0
    %v747 = vpop.f32.mrb[0].mxu0
    %748 = vdwg.mxu0
    %749 = vmatprep.subr.bf16.mxu0 0
    %750 = vmatpush1.bf16.msra.mxu0 %v558
    %751 = vmatprep.subr.bf16.mxu0 0
    %752 = vmatpush1.bf16.msra.mxu0 %v561
    %753 = vmatprep.subr.bf16.mxu0 0
    %754 = vmatpush1.bf16.msra.mxu0 %v564
    %755 = vmatprep.subr.bf16.mxu0 0
    %756 = vmatpush1.bf16.msra.mxu0 %v567
    %757 = vmatprep.subr.bf16.mxu0 0
    %758 = vmatpush1.bf16.msra.mxu0 %v570
    %759 = vmatprep.subr.bf16.mxu0 0
    %760 = vmatpush1.bf16.msra.mxu0 %v573
    %761 = vmatprep.subr.bf16.mxu0 0
    %762 = vmatpush1.bf16.msra.mxu0 %v576
    %763 = vmatprep.subr.bf16.mxu0 0
    %764 = vmatpush1.bf16.msra.mxu0 %v579
    %765 = vmatprep.subr.bf16.mxu0 0
    %766 = vmatpush1.bf16.msra.mxu0 0
    %767 = vmatprep.subr.bf16.mxu0 0
    %768 = vmatpush1.bf16.msra.mxu0 0
    %769 = vmatprep.subr.bf16.mxu0 0
    %770 = vmatpush1.bf16.msra.mxu0 0
    %771 = vmatprep.subr.bf16.mxu0 0
    %772 = vmatpush1.bf16.msra.mxu0 0
    %773 = vmatprep.subr.bf16.mxu0 0
    %774 = vmatpush1.bf16.msra.mxu0 0
    %775 = vmatprep.subr.bf16.mxu0 0
    %776 = vmatpush1.bf16.msra.mxu0 0
    %777 = vmatprep.subr.bf16.mxu0 0
    %778 = vmatpush1.bf16.msra.mxu0 0
    %779 = vmatprep.subr.bf16.mxu0 0
    %780 = vmatpush1.bf16.msra.mxu0 0
    %781 = vmatprep.mubr.bf16.mxu0 0
    %782 = vmatmul.mubr.bf16.gmra.mrb[0].mxu0 %v707
    %v783 = vpop.f32.mrb[0].mxu0
    %v784 = vadd.f32 0.0, %v783
    %v785 = vpop.f32.mrb[0].mxu0
    %v786 = vpop.f32.mrb[0].mxu0
    %v787 = vpop.f32.mrb[0].mxu0
    %788 = vdwg.mxu0
    %v789 = vadd.f32 %v396, %v743
    %v790 = vxor.u32 %v789, 2147483648
    %v791 = vmul.f32 %v790, 1.442695
    %v792 = vpow.pop %v791
    %v793 = vadd.f32 %v792, 1.0
    %v794 = vrcp.pop %v793
    %v795 = vmul.f32 1.0, %v794
    %v796 = vadd.f32 %v398, %v745
    %v797 = vxor.u32 %v796, 2147483648
    %v798 = vmul.f32 %v797, 1.442695
    %v799 = vpow.pop %v798
    %v800 = vadd.f32 %v799, 1.0
    %v801 = vrcp.pop %v800
    %v802 = vmul.f32 1.0, %v801
    %v803 = vadd.f32 %v784, %v475
    %v804 = vmul.f32 %v795, %v803
    %v805 = vadd.f32 %v437, %v804
    %v806 = vtanh.pop %v805
    %v807 = vsub.f32 1.0, %v802
    %v808 = vmul.f32 %v807, %v806
    %v809 = vmul.f32 %v802, %v706
    %v810 = vadd.f32 %v808, %v809
    %v811 = vpack.c.bf16 %v810, %v810
    %812 = vmatprep.subr.bf16.mxu0 %v557
    %813 = vmatpush1.bf16.msra.mxu0 %v556
    %814 = vmatprep.subr.bf16.mxu0 %v560
    %815 = vmatpush1.bf16.msra.mxu0 %v559
    %816 = vmatprep.subr.bf16.mxu0 %v563
    %817 = vmatpush1.bf16.msra.mxu0 %v562
    %818 = vmatprep.subr.bf16.mxu0 %v566
    %819 = vmatpush1.bf16.msra.mxu0 %v565
    %820 = vmatprep.subr.bf16.mxu0 %v569
    %821 = vmatpush1.bf16.msra.mxu0 %v568
    %822 = vmatprep.subr.bf16.mxu0 %v572
    %823 = vmatpush1.bf16.msra.mxu0 %v571
    %824 = vmatprep.subr.bf16.mxu0 %v575
    %825 = vmatpush1.bf16.msra.mxu0 %v574
    %826 = vmatprep.subr.bf16.mxu0 %v578
    %827 = vmatpush1.bf16.msra.mxu0 %v577
    %828 = vmatprep.subr.bf16.mxu0 0
    %829 = vmatpush1.bf16.msra.mxu0 0
    %830 = vmatprep.subr.bf16.mxu0 0
    %831 = vmatpush1.bf16.msra.mxu0 0
    %832 = vmatprep.subr.bf16.mxu0 0
    %833 = vmatpush1.bf16.msra.mxu0 0
    %834 = vmatprep.subr.bf16.mxu0 0
    %835 = vmatpush1.bf16.msra.mxu0 0
    %836 = vmatprep.subr.bf16.mxu0 0
    %837 = vmatpush1.bf16.msra.mxu0 0
    %838 = vmatprep.subr.bf16.mxu0 0
    %839 = vmatpush1.bf16.msra.mxu0 0
    %840 = vmatprep.subr.bf16.mxu0 0
    %841 = vmatpush1.bf16.msra.mxu0 0
    %842 = vmatprep.subr.bf16.mxu0 0
    %843 = vmatpush1.bf16.msra.mxu0 0
    %844 = vmatprep.mubr.bf16.mxu0 0
    %845 = vmatmul.mubr.bf16.gmra.mrb[0].mxu0 %v811
    %v846 = vpop.f32.mrb[0].mxu0
    %v847 = vadd.f32 0.0, %v846
    %v848 = vpop.f32.mrb[0].mxu0
    %v849 = vadd.f32 0.0, %v848
    %v850 = vpop.f32.mrb[0].mxu0
    %v851 = vpop.f32.mrb[0].mxu0
    %852 = vdwg.mxu0
    %853 = vmatprep.subr.bf16.mxu0 0
    %854 = vmatpush1.bf16.msra.mxu0 %v558
    %855 = vmatprep.subr.bf16.mxu0 0
    %856 = vmatpush1.bf16.msra.mxu0 %v561
    %857 = vmatprep.subr.bf16.mxu0 0
    %858 = vmatpush1.bf16.msra.mxu0 %v564
    %859 = vmatprep.subr.bf16.mxu0 0
    %860 = vmatpush1.bf16.msra.mxu0 %v567
    %861 = vmatprep.subr.bf16.mxu0 0
    %862 = vmatpush1.bf16.msra.mxu0 %v570
    %863 = vmatprep.subr.bf16.mxu0 0
    %864 = vmatpush1.bf16.msra.mxu0 %v573
    %865 = vmatprep.subr.bf16.mxu0 0
    %866 = vmatpush1.bf16.msra.mxu0 %v576
    %867 = vmatprep.subr.bf16.mxu0 0
    %868 = vmatpush1.bf16.msra.mxu0 %v579
    %869 = vmatprep.subr.bf16.mxu0 0
    %870 = vmatpush1.bf16.msra.mxu0 0
    %871 = vmatprep.subr.bf16.mxu0 0
    %872 = vmatpush1.bf16.msra.mxu0 0
    %873 = vmatprep.subr.bf16.mxu0 0
    %874 = vmatpush1.bf16.msra.mxu0 0
    %875 = vmatprep.subr.bf16.mxu0 0
    %876 = vmatpush1.bf16.msra.mxu0 0
    %877 = vmatprep.subr.bf16.mxu0 0
    %878 = vmatpush1.bf16.msra.mxu0 0
    %879 = vmatprep.subr.bf16.mxu0 0
    %880 = vmatpush1.bf16.msra.mxu0 0
    %881 = vmatprep.subr.bf16.mxu0 0
    %882 = vmatpush1.bf16.msra.mxu0 0
    %883 = vmatprep.subr.bf16.mxu0 0
    %884 = vmatpush1.bf16.msra.mxu0 0
    %885 = vmatprep.mubr.bf16.mxu0 0
    %886 = vmatmul.mubr.bf16.gmra.mrb[0].mxu0 %v811
    %v887 = vpop.f32.mrb[0].mxu0
    %v888 = vadd.f32 0.0, %v887
    %v889 = vpop.f32.mrb[0].mxu0
    %v890 = vpop.f32.mrb[0].mxu0
    %v891 = vpop.f32.mrb[0].mxu0
    %892 = vdwg.mxu0
    %v893 = vadd.f32 %v396, %v847
    %v894 = vxor.u32 %v893, 2147483648
    %v895 = vmul.f32 %v894, 1.442695
    %v896 = vpow.pop %v895
    %v897 = vadd.f32 %v896, 1.0
    %v898 = vrcp.pop %v897
    %v899 = vmul.f32 1.0, %v898
    %v900 = vadd.f32 %v398, %v849
    %v901 = vxor.u32 %v900, 2147483648
    %v902 = vmul.f32 %v901, 1.442695
    %v903 = vpow.pop %v902
    %v904 = vadd.f32 %v903, 1.0
    %v905 = vrcp.pop %v904
    %v906 = vmul.f32 1.0, %v905
    %v907 = vadd.f32 %v888, %v475
    %v908 = vmul.f32 %v899, %v907
    %v909 = vadd.f32 %v437, %v908
    %v910 = vtanh.pop %v909
    %v911 = vsub.f32 1.0, %v906
    %v912 = vmul.f32 %v911, %v910
    %v913 = vmul.f32 %v906, %v810
    %v914 = vadd.f32 %v912, %v913
    %v915 = vpack.c.bf16 %v914, %v914
    %916 = vmatprep.subr.bf16.mxu0 %v557
    %917 = vmatpush1.bf16.msra.mxu0 %v556
    %918 = vmatprep.subr.bf16.mxu0 %v560
    %919 = vmatpush1.bf16.msra.mxu0 %v559
    %920 = vmatprep.subr.bf16.mxu0 %v563
    %921 = vmatpush1.bf16.msra.mxu0 %v562
    %922 = vmatprep.subr.bf16.mxu0 %v566
    %923 = vmatpush1.bf16.msra.mxu0 %v565
    %924 = vmatprep.subr.bf16.mxu0 %v569
    %925 = vmatpush1.bf16.msra.mxu0 %v568
    %926 = vmatprep.subr.bf16.mxu0 %v572
    %927 = vmatpush1.bf16.msra.mxu0 %v571
    %928 = vmatprep.subr.bf16.mxu0 %v575
    %929 = vmatpush1.bf16.msra.mxu0 %v574
    %930 = vmatprep.subr.bf16.mxu0 %v578
    %931 = vmatpush1.bf16.msra.mxu0 %v577
    %932 = vmatprep.subr.bf16.mxu0 0
    %933 = vmatpush1.bf16.msra.mxu0 0
    %934 = vmatprep.subr.bf16.mxu0 0
    %935 = vmatpush1.bf16.msra.mxu0 0
    %936 = vmatprep.subr.bf16.mxu0 0
    %937 = vmatpush1.bf16.msra.mxu0 0
    %938 = vmatprep.subr.bf16.mxu0 0
    %939 = vmatpush1.bf16.msra.mxu0 0
    %940 = vmatprep.subr.bf16.mxu0 0
    %941 = vmatpush1.bf16.msra.mxu0 0
    %942 = vmatprep.subr.bf16.mxu0 0
    %943 = vmatpush1.bf16.msra.mxu0 0
    %944 = vmatprep.subr.bf16.mxu0 0
    %945 = vmatpush1.bf16.msra.mxu0 0
    %946 = vmatprep.subr.bf16.mxu0 0
    %947 = vmatpush1.bf16.msra.mxu0 0
    %948 = vmatprep.mubr.bf16.mxu0 0
    %949 = vmatmul.mubr.bf16.gmra.mrb[0].mxu0 %v915
    %v950 = vpop.f32.mrb[0].mxu0
    %v951 = vadd.f32 0.0, %v950
    %v952 = vpop.f32.mrb[0].mxu0
    %v953 = vadd.f32 0.0, %v952
    %v954 = vpop.f32.mrb[0].mxu0
    %v955 = vpop.f32.mrb[0].mxu0
    %956 = vdwg.mxu0
    %957 = vmatprep.subr.bf16.mxu0 0
    %958 = vmatpush1.bf16.msra.mxu0 %v558
    %959 = vmatprep.subr.bf16.mxu0 0
    %960 = vmatpush1.bf16.msra.mxu0 %v561
    %961 = vmatprep.subr.bf16.mxu0 0
    %962 = vmatpush1.bf16.msra.mxu0 %v564
    %963 = vmatprep.subr.bf16.mxu0 0
    %964 = vmatpush1.bf16.msra.mxu0 %v567
    %965 = vmatprep.subr.bf16.mxu0 0
    %966 = vmatpush1.bf16.msra.mxu0 %v570
    %967 = vmatprep.subr.bf16.mxu0 0
    %968 = vmatpush1.bf16.msra.mxu0 %v573
    %969 = vmatprep.subr.bf16.mxu0 0
    %970 = vmatpush1.bf16.msra.mxu0 %v576
    %971 = vmatprep.subr.bf16.mxu0 0
    %972 = vmatpush1.bf16.msra.mxu0 %v579
    %973 = vmatprep.subr.bf16.mxu0 0
    %974 = vmatpush1.bf16.msra.mxu0 0
    %975 = vmatprep.subr.bf16.mxu0 0
    %976 = vmatpush1.bf16.msra.mxu0 0
    %977 = vmatprep.subr.bf16.mxu0 0
    %978 = vmatpush1.bf16.msra.mxu0 0
    %979 = vmatprep.subr.bf16.mxu0 0
    %980 = vmatpush1.bf16.msra.mxu0 0
    %981 = vmatprep.subr.bf16.mxu0 0
    %982 = vmatpush1.bf16.msra.mxu0 0
    %983 = vmatprep.subr.bf16.mxu0 0
    %984 = vmatpush1.bf16.msra.mxu0 0
    %985 = vmatprep.subr.bf16.mxu0 0
    %986 = vmatpush1.bf16.msra.mxu0 0
    %987 = vmatprep.subr.bf16.mxu0 0
    %988 = vmatpush1.bf16.msra.mxu0 0
    %989 = vmatprep.mubr.bf16.mxu0 0
    %990 = vmatmul.mubr.bf16.gmra.mrb[0].mxu0 %v915
    %v991 = vpop.f32.mrb[0].mxu0
    %v992 = vadd.f32 0.0, %v991
    %v993 = vpop.f32.mrb[0].mxu0
    %v994 = vpop.f32.mrb[0].mxu0
    %v995 = vpop.f32.mrb[0].mxu0
    %996 = vdwg.mxu0
    %v997 = vadd.f32 %v396, %v951
    %v998 = vxor.u32 %v997, 2147483648
    %v999 = vmul.f32 %v998, 1.442695
    %v1000 = vpow.pop %v999
    %v1001 = vadd.f32 %v1000, 1.0
    %v1002 = vrcp.pop %v1001
    %v1003 = vmul.f32 1.0, %v1002
    %v1004 = vadd.f32 %v398, %v953
    %v1005 = vxor.u32 %v1004, 2147483648
    %v1006 = vmul.f32 %v1005, 1.442695
    %v1007 = vpow.pop %v1006
    %v1008 = vadd.f32 %v1007, 1.0
    %v1009 = vrcp.pop %v1008
    %v1010 = vmul.f32 1.0, %v1009
    %v1011 = vadd.f32 %v992, %v475
    %v1012 = vmul.f32 %v1003, %v1011
    %v1013 = vadd.f32 %v437, %v1012
    %v1014 = vtanh.pop %v1013
    %v1015 = vsub.f32 1.0, %v1010
    %v1016 = vmul.f32 %v1015, %v1014
    %v1017 = vmul.f32 %v1010, %v914
    %v1018 = vadd.f32 %v1016, %v1017
    %v1019 = vpack.c.bf16 %v1018, %v1018
    %1020 = vmatprep.subr.bf16.mxu0 %v557
    %1021 = vmatpush1.bf16.msra.mxu0 %v556
    %1022 = vmatprep.subr.bf16.mxu0 %v560
    %1023 = vmatpush1.bf16.msra.mxu0 %v559
    %1024 = vmatprep.subr.bf16.mxu0 %v563
    %1025 = vmatpush1.bf16.msra.mxu0 %v562
    %1026 = vmatprep.subr.bf16.mxu0 %v566
    %1027 = vmatpush1.bf16.msra.mxu0 %v565
    %1028 = vmatprep.subr.bf16.mxu0 %v569
    %1029 = vmatpush1.bf16.msra.mxu0 %v568
    %1030 = vmatprep.subr.bf16.mxu0 %v572
    %1031 = vmatpush1.bf16.msra.mxu0 %v571
    %1032 = vmatprep.subr.bf16.mxu0 %v575
    %1033 = vmatpush1.bf16.msra.mxu0 %v574
    %1034 = vmatprep.subr.bf16.mxu0 %v578
    %1035 = vmatpush1.bf16.msra.mxu0 %v577
    %1036 = vmatprep.subr.bf16.mxu0 0
    %1037 = vmatpush1.bf16.msra.mxu0 0
    %1038 = vmatprep.subr.bf16.mxu0 0
    %1039 = vmatpush1.bf16.msra.mxu0 0
    %1040 = vmatprep.subr.bf16.mxu0 0
    %1041 = vmatpush1.bf16.msra.mxu0 0
    %1042 = vmatprep.subr.bf16.mxu0 0
    %1043 = vmatpush1.bf16.msra.mxu0 0
    %1044 = vmatprep.subr.bf16.mxu0 0
    %1045 = vmatpush1.bf16.msra.mxu0 0
    %1046 = vmatprep.subr.bf16.mxu0 0
    %1047 = vmatpush1.bf16.msra.mxu0 0
    %1048 = vmatprep.subr.bf16.mxu0 0
    %1049 = vmatpush1.bf16.msra.mxu0 0
    %1050 = vmatprep.subr.bf16.mxu0 0
    %1051 = vmatpush1.bf16.msra.mxu0 0
    %1052 = vmatprep.mubr.bf16.mxu0 0
    %1053 = vmatmul.mubr.bf16.gmra.mrb[0].mxu0 %v1019
    %v1054 = vpop.f32.mrb[0].mxu0
    %v1055 = vadd.f32 0.0, %v1054
    %v1056 = vpop.f32.mrb[0].mxu0
    %v1057 = vadd.f32 0.0, %v1056
    %v1058 = vpop.f32.mrb[0].mxu0
    %v1059 = vpop.f32.mrb[0].mxu0
    %1060 = vdwg.mxu0
    %1061 = vmatprep.subr.bf16.mxu0 0
    %1062 = vmatpush1.bf16.msra.mxu0 %v558
    %1063 = vmatprep.subr.bf16.mxu0 0
    %1064 = vmatpush1.bf16.msra.mxu0 %v561
    %1065 = vmatprep.subr.bf16.mxu0 0
    %1066 = vmatpush1.bf16.msra.mxu0 %v564
    %1067 = vmatprep.subr.bf16.mxu0 0
    %1068 = vmatpush1.bf16.msra.mxu0 %v567
    %1069 = vmatprep.subr.bf16.mxu0 0
    %1070 = vmatpush1.bf16.msra.mxu0 %v570
    %1071 = vmatprep.subr.bf16.mxu0 0
    %1072 = vmatpush1.bf16.msra.mxu0 %v573
    %1073 = vmatprep.subr.bf16.mxu0 0
    %1074 = vmatpush1.bf16.msra.mxu0 %v576
    %1075 = vmatprep.subr.bf16.mxu0 0
    %1076 = vmatpush1.bf16.msra.mxu0 %v579
    %1077 = vmatprep.subr.bf16.mxu0 0
    %1078 = vmatpush1.bf16.msra.mxu0 0
    %1079 = vmatprep.subr.bf16.mxu0 0
    %1080 = vmatpush1.bf16.msra.mxu0 0
    %1081 = vmatprep.subr.bf16.mxu0 0
    %1082 = vmatpush1.bf16.msra.mxu0 0
    %1083 = vmatprep.subr.bf16.mxu0 0
    %1084 = vmatpush1.bf16.msra.mxu0 0
    %1085 = vmatprep.subr.bf16.mxu0 0
    %1086 = vmatpush1.bf16.msra.mxu0 0
    %1087 = vmatprep.subr.bf16.mxu0 0
    %1088 = vmatpush1.bf16.msra.mxu0 0
    %1089 = vmatprep.subr.bf16.mxu0 0
    %1090 = vmatpush1.bf16.msra.mxu0 0
    %1091 = vmatprep.subr.bf16.mxu0 0
    %1092 = vmatpush1.bf16.msra.mxu0 0
    %1093 = vmatprep.mubr.bf16.mxu0 0
    %1094 = vmatmul.mubr.bf16.gmra.mrb[0].mxu0 %v1019
    %v1095 = vpop.f32.mrb[0].mxu0
    %v1096 = vadd.f32 0.0, %v1095
    %v1097 = vpop.f32.mrb[0].mxu0
    %v1098 = vpop.f32.mrb[0].mxu0
    %v1099 = vpop.f32.mrb[0].mxu0
    %1100 = vdwg.mxu0
    %v1101 = vadd.f32 %v396, %v1055
    %v1102 = vxor.u32 %v1101, 2147483648
    %v1103 = vmul.f32 %v1102, 1.442695
    %v1104 = vpow.pop %v1103
    %v1105 = vadd.f32 %v1104, 1.0
    %v1106 = vrcp.pop %v1105
    %v1107 = vmul.f32 1.0, %v1106
    %v1108 = vadd.f32 %v398, %v1057
    %v1109 = vxor.u32 %v1108, 2147483648
    %v1110 = vmul.f32 %v1109, 1.442695
    %v1111 = vpow.pop %v1110
    %v1112 = vadd.f32 %v1111, 1.0
    %v1113 = vrcp.pop %v1112
    %v1114 = vmul.f32 1.0, %v1113
    %v1115 = vadd.f32 %v1096, %v475
    %v1116 = vmul.f32 %v1107, %v1115
    %v1117 = vadd.f32 %v437, %v1116
    %v1118 = vtanh.pop %v1117
    %v1119 = vsub.f32 1.0, %v1114
    %v1120 = vmul.f32 %v1119, %v1118
    %v1121 = vmul.f32 %v1114, %v1018
    %v1122 = vadd.f32 %v1120, %v1121
    %v1123 = vpack.c.bf16 %v1122, %v1122
    %1124 = vmatprep.subr.bf16.mxu0 %v557
    %1125 = vmatpush1.bf16.msra.mxu0 %v556
    %1126 = vmatprep.subr.bf16.mxu0 %v560
    %1127 = vmatpush1.bf16.msra.mxu0 %v559
    %1128 = vmatprep.subr.bf16.mxu0 %v563
    %1129 = vmatpush1.bf16.msra.mxu0 %v562
    %1130 = vmatprep.subr.bf16.mxu0 %v566
    %1131 = vmatpush1.bf16.msra.mxu0 %v565
    %1132 = vmatprep.subr.bf16.mxu0 %v569
    %1133 = vmatpush1.bf16.msra.mxu0 %v568
    %1134 = vmatprep.subr.bf16.mxu0 %v572
    %1135 = vmatpush1.bf16.msra.mxu0 %v571
    %1136 = vmatprep.subr.bf16.mxu0 %v575
    %1137 = vmatpush1.bf16.msra.mxu0 %v574
    %1138 = vmatprep.subr.bf16.mxu0 %v578
    %1139 = vmatpush1.bf16.msra.mxu0 %v577
    %1140 = vmatprep.subr.bf16.mxu0 0
    %1141 = vmatpush1.bf16.msra.mxu0 0
    %1142 = vmatprep.subr.bf16.mxu0 0
    %1143 = vmatpush1.bf16.msra.mxu0 0
    %1144 = vmatprep.subr.bf16.mxu0 0
    %1145 = vmatpush1.bf16.msra.mxu0 0
    %1146 = vmatprep.subr.bf16.mxu0 0
    %1147 = vmatpush1.bf16.msra.mxu0 0
    %1148 = vmatprep.subr.bf16.mxu0 0
    %1149 = vmatpush1.bf16.msra.mxu0 0
    %1150 = vmatprep.subr.bf16.mxu0 0
    %1151 = vmatpush1.bf16.msra.mxu0 0
    %1152 = vmatprep.subr.bf16.mxu0 0
    %1153 = vmatpush1.bf16.msra.mxu0 0
    %1154 = vmatprep.subr.bf16.mxu0 0
    %1155 = vmatpush1.bf16.msra.mxu0 0
    %1156 = vmatprep.mubr.bf16.mxu0 0
    %1157 = vmatmul.mubr.bf16.gmra.mrb[0].mxu0 %v1123
    %v1158 = vpop.f32.mrb[0].mxu0
    %v1159 = vadd.f32 0.0, %v1158
    %v1160 = vpop.f32.mrb[0].mxu0
    %v1161 = vadd.f32 0.0, %v1160
    %v1162 = vpop.f32.mrb[0].mxu0
    %v1163 = vpop.f32.mrb[0].mxu0
    %1164 = vdwg.mxu0
    %1165 = vmatprep.subr.bf16.mxu0 0
    %1166 = vmatpush1.bf16.msra.mxu0 %v558
    %1167 = vmatprep.subr.bf16.mxu0 0
    %1168 = vmatpush1.bf16.msra.mxu0 %v561
    %1169 = vmatprep.subr.bf16.mxu0 0
    %1170 = vmatpush1.bf16.msra.mxu0 %v564
    %1171 = vmatprep.subr.bf16.mxu0 0
    %1172 = vmatpush1.bf16.msra.mxu0 %v567
    %1173 = vmatprep.subr.bf16.mxu0 0
    %1174 = vmatpush1.bf16.msra.mxu0 %v570
    %1175 = vmatprep.subr.bf16.mxu0 0
    %1176 = vmatpush1.bf16.msra.mxu0 %v573
    %1177 = vmatprep.subr.bf16.mxu0 0
    %1178 = vmatpush1.bf16.msra.mxu0 %v576
    %1179 = vmatprep.subr.bf16.mxu0 0
    %1180 = vmatpush1.bf16.msra.mxu0 %v579
    %1181 = vmatprep.subr.bf16.mxu0 0
    %1182 = vmatpush1.bf16.msra.mxu0 0
    %1183 = vmatprep.subr.bf16.mxu0 0
    %1184 = vmatpush1.bf16.msra.mxu0 0
    %1185 = vmatprep.subr.bf16.mxu0 0
    %1186 = vmatpush1.bf16.msra.mxu0 0
    %1187 = vmatprep.subr.bf16.mxu0 0
    %1188 = vmatpush1.bf16.msra.mxu0 0
    %1189 = vmatprep.subr.bf16.mxu0 0
    %1190 = vmatpush1.bf16.msra.mxu0 0
    %1191 = vmatprep.subr.bf16.mxu0 0
    %1192 = vmatpush1.bf16.msra.mxu0 0
    %1193 = vmatprep.subr.bf16.mxu0 0
    %1194 = vmatpush1.bf16.msra.mxu0 0
    %1195 = vmatprep.subr.bf16.mxu0 0
    %1196 = vmatpush1.bf16.msra.mxu0 0
    %1197 = vmatprep.mubr.bf16.mxu0 0
    %1198 = vmatmul.mubr.bf16.gmra.mrb[0].mxu0 %v1123
    %v1199 = vpop.f32.mrb[0].mxu0
    %v1200 = vadd.f32 0.0, %v1199
    %v1201 = vpop.f32.mrb[0].mxu0
    %v1202 = vpop.f32.mrb[0].mxu0
    %v1203 = vpop.f32.mrb[0].mxu0
    %1204 = vdwg.mxu0
    %v1205 = vadd.f32 %v396, %v1159
    %v1206 = vxor.u32 %v1205, 2147483648
    %v1207 = vmul.f32 %v1206, 1.442695
    %v1208 = vpow.pop %v1207
    %v1209 = vadd.f32 %v1208, 1.0
    %v1210 = vrcp.pop %v1209
    %v1211 = vmul.f32 1.0, %v1210
    %v1212 = vadd.f32 %v398, %v1161
    %v1213 = vxor.u32 %v1212, 2147483648
    %v1214 = vmul.f32 %v1213, 1.442695
    %v1215 = vpow.pop %v1214
    %v1216 = vadd.f32 %v1215, 1.0
    %v1217 = vrcp.pop %v1216
    %v1218 = vmul.f32 1.0, %v1217
    %v1219 = vadd.f32 %v1200, %v475
    %v1220 = vmul.f32 %v1211, %v1219
    %v1221 = vadd.f32 %v437, %v1220
    %v1222 = vtanh.pop %v1221
    %v1223 = vsub.f32 1.0, %v1218
    %v1224 = vmul.f32 %v1223, %v1222
    %v1225 = vmul.f32 %v1218, %v1122
    %v1226 = vadd.f32 %v1224, %v1225
    %v1227 = vpack.c.bf16 %v810, %v706
    %v1228 = vpack.c.bf16 %v1018, %v914
    %v1229 = vpack.c.bf16 %v1226, %v1122
    %v1230 = vld [vmem:[#allocation5] sm:$0xff]
    %v1231 = vld [vmem:[#allocation5 + $0x8] sm:$0xff]
    %v1232 = vld [vmem:[#allocation5 + $0x10] sm:$0xff]
    %v1233 = vld [vmem:[#allocation5 + $0x18] sm:$0xff]
    %v1234 = vld [vmem:[#allocation5 + $0x20] sm:$0xff]
    %v1235 = vld [vmem:[#allocation5 + $0x28] sm:$0xff]
    %v1236 = vpack.c.bf16 %v1231, %v1230
    %v1237 = vpack.c.bf16 %v1233, %v1232
    %v1238 = vpack.c.bf16 %v1235, %v1234
    %v1239 = vld [vmem:[#allocation8 + $0x4c] sm:$0xf]
    %v1240 = vld [vmem:[#allocation8 + $0x50] sm:$0xf]
    %v1241 = vld [vmem:[#allocation8 + $0x54] sm:$0xf]
    %v1242 = vld [vmem:[#allocation8 + $0x58] sm:$0xf]
    %v1243 = vld [vmem:[#allocation8 + $0x5c] sm:$0xf]
    %v1244 = vld [vmem:[#allocation8 + $0x60] sm:$0xf]
    %v1245 = vld [vmem:[#allocation8 + $0x64] sm:$0xf]
    %v1246 = vld [vmem:[#allocation8 + $0x68] sm:$0xf]
    %v1247 = vld [vmem:[#allocation8 + $0x6c] sm:$0xf]
    %v1248 = vld [vmem:[#allocation8 + $0x70] sm:$0xf]
    %v1259 = vunpack.c.l.b16 %v1239
    %v1260 = vunpack.c.l.b16 %v1240
    %v1261 = vunpack.c.l.b16 %v1241
    %v1262 = vunpack.c.l.b16 %v1242
    %v1263 = vunpack.c.l.b16 %v1243
    %v1264 = vunpack.c.l.b16 %v1244
    %v1265 = vunpack.c.l.b16 %v1245
    %v1266 = vunpack.c.l.b16 %v1246
    %v1267 = vunpack.c.l.b16 %v1247
    %v1268 = vunpack.c.l.b16 %v1248
    %v1269 = vpack.c.b16 %v1260, %v1259
    %v1270 = vpack.c.b16 %v1262, %v1261
    %v1271 = vpack.c.b16 %v1264, %v1263
    %v1272 = vpack.c.b16 %v1266, %v1265
    %v1273 = vpack.c.b16 %v1268, %v1267
    %vm1279 = vcmask 654336
    %v1281 = vsel %vm1279, %v1236, 0
    %v1284 = vsel %vm1279, %v1237, 0
    %v1287 = vsel %vm1279, %v1238, 0
    %1289 = vmatprep.subr.bf16.mxu0 0
    %1290 = vmatpush1.bf16.msra.mxu0 %v1269
    %1291 = vmatprep.subr.bf16.mxu0 0
    %1292 = vmatpush1.bf16.msra.mxu0 %v1270
    %1293 = vmatprep.subr.bf16.mxu0 0
    %1294 = vmatpush1.bf16.msra.mxu0 %v1271
    %1295 = vmatprep.subr.bf16.mxu0 0
    %1296 = vmatpush1.bf16.msra.mxu0 %v1272
    %1297 = vmatprep.subr.bf16.mxu0 0
    %1298 = vmatpush1.bf16.msra.mxu0 %v1273
    %1299 = vmatprep.subr.bf16.mxu0 0
    %1300 = vmatpush1.bf16.msra.mxu0 0
    %1301 = vmatprep.subr.bf16.mxu0 0
    %1302 = vmatpush1.bf16.msra.mxu0 0
    %1303 = vmatprep.subr.bf16.mxu0 0
    %1304 = vmatpush1.bf16.msra.mxu0 0
    %1305 = vmatprep.subr.bf16.mxu0 0
    %1306 = vmatpush1.bf16.msra.mxu0 0
    %1307 = vmatprep.subr.bf16.mxu0 0
    %1308 = vmatpush1.bf16.msra.mxu0 0
    %1309 = vmatprep.subr.bf16.mxu0 0
    %1310 = vmatpush1.bf16.msra.mxu0 0
    %1311 = vmatprep.subr.bf16.mxu0 0
    %1312 = vmatpush1.bf16.msra.mxu0 0
    %1313 = vmatprep.subr.bf16.mxu0 0
    %1314 = vmatpush1.bf16.msra.mxu0 0
    %1315 = vmatprep.subr.bf16.mxu0 0
    %1316 = vmatpush1.bf16.msra.mxu0 0
    %1317 = vmatprep.subr.bf16.mxu0 0
    %1318 = vmatpush1.bf16.msra.mxu0 0
    %1319 = vmatprep.subr.bf16.mxu0 0
    %1320 = vmatpush1.bf16.msra.mxu0 0
    %1321 = vmatprep.mubr.bf16.mxu0 0
    %1322 = vmatmul.mubr.bf16.gmra.mrb[0].mxu0 %v1281
    %v1323 = vpop.f32.mrb[0].mxu0
    %v1324 = vadd.f32 0.0, %v1323
    %v1325 = vpop.f32.mrb[0].mxu0
    %v1326 = vpop.f32.mrb[0].mxu0
    %v1327 = vadd.f32 0.0, %v1326
    %v1328 = vpop.f32.mrb[0].mxu0
    %1329 = vmatprep.mubr.bf16.mxu0 0
    %1330 = vmatmul.mubr.bf16.gmra.mrb[0].mxu0 %v1284
    %v1331 = vpop.f32.mrb[0].mxu0
    %v1332 = vadd.f32 0.0, %v1331
    %v1333 = vpop.f32.mrb[0].mxu0
    %v1334 = vpop.f32.mrb[0].mxu0
    %v1335 = vadd.f32 0.0, %v1334
    %v1336 = vpop.f32.mrb[0].mxu0
    %1337 = vmatprep.mubr.bf16.mxu0 0
    %1338 = vmatmul.mubr.bf16.gmra.mrb[0].mxu0 %v1287
    %v1339 = vpop.f32.mrb[0].mxu0
    %v1340 = vadd.f32 0.0, %v1339
    %v1341 = vpop.f32.mrb[0].mxu0
    %v1342 = vpop.f32.mrb[0].mxu0
    %v1343 = vadd.f32 0.0, %v1342
    %v1344 = vpop.f32.mrb[0].mxu0
    %1345 = vdwg.mxu0
    %v1346 = vld [vmem:[#allocation8 + $0x74] sm:$0xf]
    %v1347 = vld [vmem:[#allocation8 + $0x78] sm:$0xf]
    %v1348 = vld [vmem:[#allocation8 + $0x7c] sm:$0xf]
    %v1349 = vld [vmem:[#allocation8 + $0x80] sm:$0xf]
    %v1350 = vld [vmem:[#allocation8 + $0x84] sm:$0xf]
    %v1351 = vld [vmem:[#allocation8 + $0x88] sm:$0xf]
    %v1352 = vld [vmem:[#allocation8 + $0x8c] sm:$0xf]
    %v1353 = vld [vmem:[#allocation8 + $0x90] sm:$0xf]
    %v1354 = vld [vmem:[#allocation8 + $0x94] sm:$0xf]
    %v1355 = vld [vmem:[#allocation8 + $0x98] sm:$0xf]
    %v1356 = vld [vmem:[#allocation8 + $0x9c] sm:$0xf]
    %v1357 = vld [vmem:[#allocation8 + $0xa0] sm:$0xf]
    %v1358 = vld [vmem:[#allocation8 + $0xa4] sm:$0xf]
    %v1359 = vld [vmem:[#allocation8 + $0xa8] sm:$0xf]
    %v1360 = vld [vmem:[#allocation8 + $0xac] sm:$0xf]
    %v1361 = vld [vmem:[#allocation8 + $0xb0] sm:$0xf]
    %v1362 = vld [vmem:[#allocation8 + $0xb4] sm:$0xf]
    %v1363 = vld [vmem:[#allocation8 + $0xb8] sm:$0xf]
    %v1364 = vld [vmem:[#allocation8 + $0xbc] sm:$0xf]
    %v1365 = vld [vmem:[#allocation8 + $0xc0] sm:$0xf]
    %v1366 = vld [vmem:[#allocation8 + $0xc4] sm:$0xf]
    %v1367 = vld [vmem:[#allocation8 + $0xc8] sm:$0xf]
    %v1368 = vld [vmem:[#allocation8 + $0xcc] sm:$0xf]
    %v1369 = vld [vmem:[#allocation8 + $0xd0] sm:$0xf]
    %v1370 = vld [vmem:[#allocation8 + $0xd4] sm:$0xf]
    %v1371 = vld [vmem:[#allocation8 + $0xd8] sm:$0xf]
    %v1382 = vunpack.c.l.b16 %v1362
    %v1383 = vunpack.c.l.b16 %v1363
    %v1384 = vunpack.c.l.b16 %v1364
    %v1385 = vunpack.c.l.b16 %v1365
    %v1386 = vunpack.c.l.b16 %v1366
    %v1387 = vunpack.c.l.b16 %v1367
    %v1388 = vunpack.c.l.b16 %v1368
    %v1389 = vunpack.c.l.b16 %v1369
    %v1390 = vunpack.c.l.b16 %v1370
    %v1391 = vunpack.c.l.b16 %v1371
    %v1392 = vpack.c.b16 %v1383, %v1382
    %v1393 = vpack.c.b16 %v1385, %v1384
    %v1394 = vpack.c.b16 %v1387, %v1386
    %v1395 = vpack.c.b16 %v1389, %v1388
    %v1396 = vpack.c.b16 %v1391, %v1390
    %1402 = vmatprep.subr.bf16.mxu0 0
    %1403 = vmatpush1.bf16.msra.mxu0 %v1392
    %1404 = vmatprep.subr.bf16.mxu0 0
    %1405 = vmatpush1.bf16.msra.mxu0 %v1393
    %1406 = vmatprep.subr.bf16.mxu0 0
    %1407 = vmatpush1.bf16.msra.mxu0 %v1394
    %1408 = vmatprep.subr.bf16.mxu0 0
    %1409 = vmatpush1.bf16.msra.mxu0 %v1395
    %1410 = vmatprep.subr.bf16.mxu0 0
    %1411 = vmatpush1.bf16.msra.mxu0 %v1396
    %1412 = vmatprep.subr.bf16.mxu0 0
    %1413 = vmatpush1.bf16.msra.mxu0 0
    %1414 = vmatprep.subr.bf16.mxu0 0
    %1415 = vmatpush1.bf16.msra.mxu0 0
    %1416 = vmatprep.subr.bf16.mxu0 0
    %1417 = vmatpush1.bf16.msra.mxu0 0
    %1418 = vmatprep.subr.bf16.mxu0 0
    %1419 = vmatpush1.bf16.msra.mxu0 0
    %1420 = vmatprep.subr.bf16.mxu0 0
    %1421 = vmatpush1.bf16.msra.mxu0 0
    %1422 = vmatprep.subr.bf16.mxu0 0
    %1423 = vmatpush1.bf16.msra.mxu0 0
    %1424 = vmatprep.subr.bf16.mxu0 0
    %1425 = vmatpush1.bf16.msra.mxu0 0
    %1426 = vmatprep.subr.bf16.mxu0 0
    %1427 = vmatpush1.bf16.msra.mxu0 0
    %1428 = vmatprep.subr.bf16.mxu0 0
    %1429 = vmatpush1.bf16.msra.mxu0 0
    %1430 = vmatprep.subr.bf16.mxu0 0
    %1431 = vmatpush1.bf16.msra.mxu0 0
    %1432 = vmatprep.subr.bf16.mxu0 0
    %1433 = vmatpush1.bf16.msra.mxu0 0
    %1434 = vmatprep.mubr.bf16.mxu0 0
    %1435 = vmatmul.mubr.bf16.gmra.mrb[0].mxu0 %v1281
    %v1436 = vpop.f32.mrb[0].mxu0
    %v1437 = vadd.f32 0.0, %v1436
    %v1438 = vpop.f32.mrb[0].mxu0
    %v1439 = vpop.f32.mrb[0].mxu0
    %v1440 = vadd.f32 0.0, %v1439
    %v1441 = vpop.f32.mrb[0].mxu0
    %1442 = vmatprep.mubr.bf16.mxu0 0
    %1443 = vmatmul.mubr.bf16.gmra.mrb[0].mxu0 %v1284
    %v1444 = vpop.f32.mrb[0].mxu0
    %v1445 = vadd.f32 0.0, %v1444
    %v1446 = vpop.f32.mrb[0].mxu0
    %v1447 = vpop.f32.mrb[0].mxu0
    %v1448 = vadd.f32 0.0, %v1447
    %v1449 = vpop.f32.mrb[0].mxu0
    %1450 = vmatprep.mubr.bf16.mxu0 0
    %1451 = vmatmul.mubr.bf16.gmra.mrb[0].mxu0 %v1287
    %v1452 = vpop.f32.mrb[0].mxu0
    %v1453 = vadd.f32 0.0, %v1452
    %v1454 = vpop.f32.mrb[0].mxu0
    %v1455 = vpop.f32.mrb[0].mxu0
    %v1456 = vadd.f32 0.0, %v1455
    %v1457 = vpop.f32.mrb[0].mxu0
    %1458 = vdwg.mxu0
    %v1475 = vunpack.c.l.b16 %v1346
    %v1476 = vunpack.c.l.b16 %v1347
    %v1477 = vunpack.c.l.b16 %v1348
    %v1478 = vunpack.c.l.b16 %v1349
    %v1479 = vunpack.c.l.b16 %v1350
    %v1480 = vunpack.c.l.b16 %v1351
    %v1481 = vunpack.c.l.b16 %v1352
    %v1482 = vunpack.c.l.b16 %v1353
    %v1483 = vunpack.c.l.b16 %v1354
    %v1484 = vunpack.c.l.b16 %v1355
    %v1485 = vunpack.c.l.b16 %v1356
    %v1486 = vunpack.c.l.b16 %v1357
    %v1487 = vunpack.c.l.b16 %v1358
    %v1488 = vunpack.c.l.b16 %v1359
    %v1489 = vunpack.c.l.b16 %v1360
    %v1490 = vunpack.c.l.b16 %v1361
    %v1491 = vpack.c.b16 %v1476, %v1475
    %v1492 = vpack.c.b16 %v1478, %v1477
    %v1493 = vpack.c.b16 %v1480, %v1479
    %v1494 = vpack.c.b16 %v1482, %v1481
    %v1495 = vpack.c.b16 %v1484, %v1483
    %v1496 = vpack.c.b16 %v1486, %v1485
    %v1497 = vpack.c.b16 %v1488, %v1487
    %v1498 = vpack.c.b16 %v1490, %v1489
    %1507 = vmatprep.subr.bf16.mxu0 0
    %1508 = vmatpush1.bf16.msra.mxu0 %v1491
    %1509 = vmatprep.subr.bf16.mxu0 0
    %1510 = vmatpush1.bf16.msra.mxu0 %v1492
    %1511 = vmatprep.subr.bf16.mxu0 0
    %1512 = vmatpush1.bf16.msra.mxu0 %v1493
    %1513 = vmatprep.subr.bf16.mxu0 0
    %1514 = vmatpush1.bf16.msra.mxu0 %v1494
    %1515 = vmatprep.subr.bf16.mxu0 0
    %1516 = vmatpush1.bf16.msra.mxu0 %v1495
    %1517 = vmatprep.subr.bf16.mxu0 0
    %1518 = vmatpush1.bf16.msra.mxu0 %v1496
    %1519 = vmatprep.subr.bf16.mxu0 0
    %1520 = vmatpush1.bf16.msra.mxu0 %v1497
    %1521 = vmatprep.subr.bf16.mxu0 0
    %1522 = vmatpush1.bf16.msra.mxu0 %v1498
    %1523 = vmatprep.subr.bf16.mxu0 0
    %1524 = vmatpush1.bf16.msra.mxu0 0
    %1525 = vmatprep.subr.bf16.mxu0 0
    %1526 = vmatpush1.bf16.msra.mxu0 0
    %1527 = vmatprep.subr.bf16.mxu0 0
    %1528 = vmatpush1.bf16.msra.mxu0 0
    %1529 = vmatprep.subr.bf16.mxu0 0
    %1530 = vmatpush1.bf16.msra.mxu0 0
    %1531 = vmatprep.subr.bf16.mxu0 0
    %1532 = vmatpush1.bf16.msra.mxu0 0
    %1533 = vmatprep.subr.bf16.mxu0 0
    %1534 = vmatpush1.bf16.msra.mxu0 0
    %1535 = vmatprep.subr.bf16.mxu0 0
    %1536 = vmatpush1.bf16.msra.mxu0 0
    %1537 = vmatprep.subr.bf16.mxu0 0
    %1538 = vmatpush1.bf16.msra.mxu0 0
    %1539 = vmatprep.mubr.bf16.mxu0 0
    %1540 = vmatmul.mubr.bf16.gmra.mrb[0].mxu0 %v1227
    %v1541 = vpop.f32.mrb[0].mxu0
    %v1542 = vadd.f32 %v1437, %v1541
    %v1543 = vpop.f32.mrb[0].mxu0
    %v1544 = vpop.f32.mrb[0].mxu0
    %v1545 = vadd.f32 %v1440, %v1544
    %v1546 = vpop.f32.mrb[0].mxu0
    %1547 = vmatprep.mubr.bf16.mxu0 0
    %1548 = vmatmul.mubr.bf16.gmra.mrb[0].mxu0 %v1228
    %v1549 = vpop.f32.mrb[0].mxu0
    %v1550 = vadd.f32 %v1445, %v1549
    %v1551 = vpop.f32.mrb[0].mxu0
    %v1552 = vpop.f32.mrb[0].mxu0
    %v1553 = vadd.f32 %v1448, %v1552
    %v1554 = vpop.f32.mrb[0].mxu0
    %1555 = vmatprep.mubr.bf16.mxu0 0
    %1556 = vmatmul.mubr.bf16.gmra.mrb[0].mxu0 %v1229
    %v1557 = vpop.f32.mrb[0].mxu0
    %v1558 = vadd.f32 %v1453, %v1557
    %v1559 = vpop.f32.mrb[0].mxu0
    %v1560 = vpop.f32.mrb[0].mxu0
    %v1561 = vadd.f32 %v1456, %v1560
    %v1562 = vpop.f32.mrb[0].mxu0
    %1563 = vdwg.mxu0
    %v1564 = vpack.c.bf16 %v1327, %v1324
    %v1565 = vpack.c.bf16 %v1335, %v1332
    %v1566 = vpack.c.bf16 %v1343, %v1340
    %v1567 = vld [vmem:[#allocation8 + $0xdc] sm:$0xf]
    %v1568 = vld [vmem:[#allocation8 + $0xe0] sm:$0xf]
    %v1569 = vld [vmem:[#allocation8 + $0xe4] sm:$0xf]
    %v1570 = vld [vmem:[#allocation8 + $0xe8] sm:$0xf]
    %v1571 = vld [vmem:[#allocation8 + $0xec] sm:$0xf]
    %v1572 = vld [vmem:[#allocation8 + $0xf0] sm:$0xf]
    %v1573 = vld [vmem:[#allocation8 + $0xf4] sm:$0xf]
    %v1574 = vld [vmem:[#allocation8 + $0xf8] sm:$0xf]
    %v1575 = vld [vmem:[#allocation8 + $0xfc] sm:$0xf]
    %v1576 = vld [vmem:[#allocation8 + $0x100] sm:$0xf]
    %v1577 = vld [vmem:[#allocation8 + $0x104] sm:$0xf]
    %v1578 = vld [vmem:[#allocation8 + $0x108] sm:$0xf]
    %v1579 = vld [vmem:[#allocation8 + $0x10c] sm:$0xf]
    %v1580 = vld [vmem:[#allocation8 + $0x110] sm:$0xf]
    %v1581 = vld [vmem:[#allocation8 + $0x114] sm:$0xf]
    %v1582 = vld [vmem:[#allocation8 + $0x118] sm:$0xf]
    %v1599 = vunpack.c.l.b16 %v1567
    %v1600 = vunpack.c.l.b16 %v1568
    %v1601 = vunpack.c.l.b16 %v1569
    %v1602 = vunpack.c.l.b16 %v1570
    %v1603 = vunpack.c.l.b16 %v1571
    %v1604 = vunpack.c.l.b16 %v1572
    %v1605 = vunpack.c.l.b16 %v1573
    %v1606 = vunpack.c.l.b16 %v1574
    %v1607 = vunpack.c.l.b16 %v1575
    %v1608 = vunpack.c.l.b16 %v1576
    %v1609 = vunpack.c.l.b16 %v1577
    %v1610 = vunpack.c.l.b16 %v1578
    %v1611 = vunpack.c.l.b16 %v1579
    %v1612 = vunpack.c.l.b16 %v1580
    %v1613 = vunpack.c.l.b16 %v1581
    %v1614 = vunpack.c.l.b16 %v1582
    %v1615 = vpack.c.b16 %v1600, %v1599
    %v1616 = vpack.c.b16 %v1602, %v1601
    %v1617 = vpack.c.b16 %v1604, %v1603
    %v1618 = vpack.c.b16 %v1606, %v1605
    %v1619 = vpack.c.b16 %v1608, %v1607
    %v1620 = vpack.c.b16 %v1610, %v1609
    %v1621 = vpack.c.b16 %v1612, %v1611
    %v1622 = vpack.c.b16 %v1614, %v1613
    %1631 = vmatprep.subr.bf16.mxu0 0
    %1632 = vmatpush1.bf16.msra.mxu0 %v1615
    %1633 = vmatprep.subr.bf16.mxu0 0
    %1634 = vmatpush1.bf16.msra.mxu0 %v1616
    %1635 = vmatprep.subr.bf16.mxu0 0
    %1636 = vmatpush1.bf16.msra.mxu0 %v1617
    %1637 = vmatprep.subr.bf16.mxu0 0
    %1638 = vmatpush1.bf16.msra.mxu0 %v1618
    %1639 = vmatprep.subr.bf16.mxu0 0
    %1640 = vmatpush1.bf16.msra.mxu0 %v1619
    %1641 = vmatprep.subr.bf16.mxu0 0
    %1642 = vmatpush1.bf16.msra.mxu0 %v1620
    %1643 = vmatprep.subr.bf16.mxu0 0
    %1644 = vmatpush1.bf16.msra.mxu0 %v1621
    %1645 = vmatprep.subr.bf16.mxu0 0
    %1646 = vmatpush1.bf16.msra.mxu0 %v1622
    %1647 = vmatprep.subr.bf16.mxu0 0
    %1648 = vmatpush1.bf16.msra.mxu0 0
    %1649 = vmatprep.subr.bf16.mxu0 0
    %1650 = vmatpush1.bf16.msra.mxu0 0
    %1651 = vmatprep.subr.bf16.mxu0 0
    %1652 = vmatpush1.bf16.msra.mxu0 0
    %1653 = vmatprep.subr.bf16.mxu0 0
    %1654 = vmatpush1.bf16.msra.mxu0 0
    %1655 = vmatprep.subr.bf16.mxu0 0
    %1656 = vmatpush1.bf16.msra.mxu0 0
    %1657 = vmatprep.subr.bf16.mxu0 0
    %1658 = vmatpush1.bf16.msra.mxu0 0
    %1659 = vmatprep.subr.bf16.mxu0 0
    %1660 = vmatpush1.bf16.msra.mxu0 0
    %1661 = vmatprep.subr.bf16.mxu0 0
    %1662 = vmatpush1.bf16.msra.mxu0 0
    %1663 = vmatprep.mubr.bf16.mxu0 0
    %1664 = vmatmul.mubr.bf16.gmra.mrb[0].mxu0 %v1564
    %v1665 = vpop.f32.mrb[0].mxu0
    %v1666 = vadd.f32 0.0, %v1665
    %v1667 = vpop.f32.mrb[0].mxu0
    %v1668 = vpop.f32.mrb[0].mxu0
    %v1669 = vadd.f32 0.0, %v1668
    %v1670 = vpop.f32.mrb[0].mxu0
    %1671 = vmatprep.mubr.bf16.mxu0 0
    %1672 = vmatmul.mubr.bf16.gmra.mrb[0].mxu0 %v1565
    %v1673 = vpop.f32.mrb[0].mxu0
    %v1674 = vadd.f32 0.0, %v1673
    %v1675 = vpop.f32.mrb[0].mxu0
    %v1676 = vpop.f32.mrb[0].mxu0
    %v1677 = vadd.f32 0.0, %v1676
    %v1678 = vpop.f32.mrb[0].mxu0
    %1679 = vmatprep.mubr.bf16.mxu0 0
    %1680 = vmatmul.mubr.bf16.gmra.mrb[0].mxu0 %v1566
    %v1681 = vpop.f32.mrb[0].mxu0
    %v1682 = vadd.f32 0.0, %v1681
    %v1683 = vpop.f32.mrb[0].mxu0
    %v1684 = vpop.f32.mrb[0].mxu0
    %v1685 = vadd.f32 0.0, %v1684
    %v1686 = vpop.f32.mrb[0].mxu0
    %1687 = vdwg.mxu0
    %v1688 = vadd.f32 %v1542, %v1666
    %v1689 = vadd.f32 %v1545, %v1669
    %v1690 = vadd.f32 %v1550, %v1674
    %v1691 = vadd.f32 %v1553, %v1677
    %v1692 = vadd.f32 %v1558, %v1682
    %v1693 = vadd.f32 %v1561, %v1685
    %v1694 = vpack.c.bf16 %v1689, %v1688
    %v1695 = vpack.c.bf16 %v1691, %v1690
    %v1696 = vpack.c.bf16 %v1693, %v1692
    %v1697 = vld [vmem:[#allocation8 + $0x11c] sm:$0xf]
    %v1698 = vld [vmem:[#allocation8 + $0x120] sm:$0xf]
    %v1699 = vld [vmem:[#allocation8 + $0x124] sm:$0xf]
    %v1700 = vld [vmem:[#allocation8 + $0x128] sm:$0xf]
    %v1701 = vld [vmem:[#allocation8 + $0x12c] sm:$0xf]
    %v1702 = vld [vmem:[#allocation8 + $0x130] sm:$0xf]
    %v1703 = vld [vmem:[#allocation8 + $0x134] sm:$0xf]
    %v1704 = vld [vmem:[#allocation8 + $0x138] sm:$0xf]
    %v1705 = vld [vmem:[#allocation8 + $0x13c] sm:$0xf]
    %v1706 = vld [vmem:[#allocation8 + $0x140] sm:$0xf]
    %v1707 = vld [vmem:[#allocation8 + $0x144] sm:$0xf]
    %v1708 = vld [vmem:[#allocation8 + $0x148] sm:$0xf]
    %v1709 = vld [vmem:[#allocation8 + $0x14c] sm:$0xf]
    %v1710 = vld [vmem:[#allocation8 + $0x150] sm:$0xf]
    %v1711 = vld [vmem:[#allocation8 + $0x154] sm:$0xf]
    %v1712 = vld [vmem:[#allocation8 + $0x158] sm:$0xf]
    %v1729 = vunpack.c.l.b16 %v1697
    %v1730 = vunpack.c.l.b16 %v1698
    %v1731 = vunpack.c.l.b16 %v1699
    %v1732 = vunpack.c.l.b16 %v1700
    %v1733 = vunpack.c.l.b16 %v1701
    %v1734 = vunpack.c.l.b16 %v1702
    %v1735 = vunpack.c.l.b16 %v1703
    %v1736 = vunpack.c.l.b16 %v1704
    %v1737 = vunpack.c.l.b16 %v1705
    %v1738 = vunpack.c.l.b16 %v1706
    %v1739 = vunpack.c.l.b16 %v1707
    %v1740 = vunpack.c.l.b16 %v1708
    %v1741 = vunpack.c.l.b16 %v1709
    %v1742 = vunpack.c.l.b16 %v1710
    %v1743 = vunpack.c.l.b16 %v1711
    %v1744 = vunpack.c.l.b16 %v1712
    %v1745 = vpack.c.b16 %v1730, %v1729
    %v1746 = vpack.c.b16 %v1732, %v1731
    %v1747 = vpack.c.b16 %v1734, %v1733
    %v1748 = vpack.c.b16 %v1736, %v1735
    %v1749 = vpack.c.b16 %v1738, %v1737
    %v1750 = vpack.c.b16 %v1740, %v1739
    %v1751 = vpack.c.b16 %v1742, %v1741
    %v1752 = vpack.c.b16 %v1744, %v1743
    %1761 = vmatprep.subr.bf16.mxu0 0
    %1762 = vmatpush1.bf16.msra.mxu0 %v1745
    %1763 = vmatprep.subr.bf16.mxu0 0
    %1764 = vmatpush1.bf16.msra.mxu0 %v1746
    %1765 = vmatprep.subr.bf16.mxu0 0
    %1766 = vmatpush1.bf16.msra.mxu0 %v1747
    %1767 = vmatprep.subr.bf16.mxu0 0
    %1768 = vmatpush1.bf16.msra.mxu0 %v1748
    %1769 = vmatprep.subr.bf16.mxu0 0
    %1770 = vmatpush1.bf16.msra.mxu0 %v1749
    %1771 = vmatprep.subr.bf16.mxu0 0
    %1772 = vmatpush1.bf16.msra.mxu0 %v1750
    %1773 = vmatprep.subr.bf16.mxu0 0
    %1774 = vmatpush1.bf16.msra.mxu0 %v1751
    %1775 = vmatprep.subr.bf16.mxu0 0
    %1776 = vmatpush1.bf16.msra.mxu0 %v1752
    %1777 = vmatprep.subr.bf16.mxu0 0
    %1778 = vmatpush1.bf16.msra.mxu0 0
    %1779 = vmatprep.subr.bf16.mxu0 0
    %1780 = vmatpush1.bf16.msra.mxu0 0
    %1781 = vmatprep.subr.bf16.mxu0 0
    %1782 = vmatpush1.bf16.msra.mxu0 0
    %1783 = vmatprep.subr.bf16.mxu0 0
    %1784 = vmatpush1.bf16.msra.mxu0 0
    %1785 = vmatprep.subr.bf16.mxu0 0
    %1786 = vmatpush1.bf16.msra.mxu0 0
    %1787 = vmatprep.subr.bf16.mxu0 0
    %1788 = vmatpush1.bf16.msra.mxu0 0
    %1789 = vmatprep.subr.bf16.mxu0 0
    %1790 = vmatpush1.bf16.msra.mxu0 0
    %1791 = vmatprep.subr.bf16.mxu0 0
    %1792 = vmatpush1.bf16.msra.mxu0 0
    %1793 = vmatprep.mubr.bf16.mxu0 0
    %1794 = vmatmul.mubr.bf16.gmra.mrb[0].mxu0 %v1694
    %v1795 = vpop.f32.mrb[0].mxu0
    %v1796 = vadd.f32 0.0, %v1795
    %v1797 = vpop.f32.mrb[0].mxu0
    %v1798 = vpop.f32.mrb[0].mxu0
    %v1799 = vadd.f32 0.0, %v1798
    %v1800 = vpop.f32.mrb[0].mxu0
    %1801 = vmatprep.mubr.bf16.mxu0 0
    %1802 = vmatmul.mubr.bf16.gmra.mrb[0].mxu0 %v1695
    %v1803 = vpop.f32.mrb[0].mxu0
    %v1804 = vadd.f32 0.0, %v1803
    %v1805 = vpop.f32.mrb[0].mxu0
    %v1806 = vpop.f32.mrb[0].mxu0
    %v1807 = vadd.f32 0.0, %v1806
    %v1808 = vpop.f32.mrb[0].mxu0
    %1809 = vmatprep.mubr.bf16.mxu0 0
    %1810 = vmatmul.mubr.bf16.gmra.mrb[0].mxu0 %v1696
    %v1811 = vpop.f32.mrb[0].mxu0
    %v1812 = vadd.f32 0.0, %v1811
    %v1813 = vpop.f32.mrb[0].mxu0
    %v1814 = vpop.f32.mrb[0].mxu0
    %v1815 = vadd.f32 0.0, %v1814
    %v1816 = vpop.f32.mrb[0].mxu0
    %1817 = vdwg.mxu0
    %v1818 = vmul.f32 %v1796, 1.1111112
    %v1819 = vmul.f32 %v1799, 1.1111112
    %v1820 = vmul.f32 %v1804, 1.1111112
    %v1821 = vmul.f32 %v1807, 1.1111112
    %v1822 = vmul.f32 %v1812, 1.1111112
    %v1823 = vmul.f32 %v1815, 1.1111112
    %v1824 = vxor.u32 %v1818, 2147483648
    %v1825 = vxor.u32 %v1819, 2147483648
    %v1826 = vxor.u32 %v1820, 2147483648
    %v1827 = vxor.u32 %v1821, 2147483648
    %v1828 = vxor.u32 %v1822, 2147483648
    %v1829 = vxor.u32 %v1823, 2147483648
    %v1830 = vmul.f32 %v1824, 1.442695
    %v1831 = vpow.pop %v1830
    %v1832 = vmul.f32 %v1825, 1.442695
    %v1833 = vpow.pop %v1832
    %v1834 = vmul.f32 %v1826, 1.442695
    %v1835 = vpow.pop %v1834
    %v1836 = vmul.f32 %v1827, 1.442695
    %v1837 = vpow.pop %v1836
    %v1838 = vmul.f32 %v1828, 1.442695
    %v1839 = vpow.pop %v1838
    %v1840 = vmul.f32 %v1829, 1.442695
    %v1841 = vpow.pop %v1840
    %v1842 = vadd.f32 %v1831, 1.0
    %v1843 = vadd.f32 %v1833, 1.0
    %v1844 = vadd.f32 %v1835, 1.0
    %v1845 = vadd.f32 %v1837, 1.0
    %v1846 = vadd.f32 %v1839, 1.0
    %v1847 = vadd.f32 %v1841, 1.0
    %v1848 = vrcp.pop %v1842
    %v1849 = vmul.f32 1.0, %v1848
    %v1850 = vrcp.pop %v1843
    %v1851 = vmul.f32 1.0, %v1850
    %v1852 = vrcp.pop %v1844
    %v1853 = vmul.f32 1.0, %v1852
    %v1854 = vrcp.pop %v1845
    %v1855 = vmul.f32 1.0, %v1854
    %v1856 = vrcp.pop %v1846
    %v1857 = vmul.f32 1.0, %v1856
    %v1858 = vrcp.pop %v1847
    %v1859 = vmul.f32 1.0, %v1858
    %v1860 = vmul.f32 %v1849, 0.9
    %v1861 = vmul.f32 %v1851, 0.9
    %v1862 = vmul.f32 %v1853, 0.9
    %v1863 = vmul.f32 %v1855, 0.9
    %v1864 = vmul.f32 %v1857, 0.9
    %v1865 = vmul.f32 %v1859, 0.9
    %v1866 = vadd.f32 %v1860, 0.1
    %v1867 = vadd.f32 %v1861, 0.1
    %v1868 = vadd.f32 %v1862, 0.1
    %v1869 = vadd.f32 %v1863, 0.1
    %v1870 = vadd.f32 %v1864, 0.1
    %v1871 = vadd.f32 %v1865, 0.1
    %1878 = vrot.lane.b32.xlu0 %v1866, 8
    %v1879 = vpop.permute.xlu0 %1878
    %1880 = vrot.lane.b32.xlu0 %v1867, 8
    %v1881 = vpop.permute.xlu0 %1880
    %1882 = vrot.lane.b32.xlu0 %v1868, 8
    %v1883 = vpop.permute.xlu0 %1882
    %1884 = vrot.lane.b32.xlu0 %v1869, 8
    %v1885 = vpop.permute.xlu0 %1884
    %1886 = vrot.lane.b32.xlu0 %v1870, 8
    %v1887 = vpop.permute.xlu0 %1886
    %1888 = vrot.lane.b32.xlu0 %v1871, 8
    %v1889 = vpop.permute.xlu0 %1888
    %v1896 = vmul.f32 %v1230, %v1879
    %v1897 = vmul.f32 %v1231, %v1881
    %v1898 = vmul.f32 %v1232, %v1883
    %v1899 = vmul.f32 %v1233, %v1885
    %v1900 = vmul.f32 %v1234, %v1887
    %v1901 = vmul.f32 %v1235, %v1889
    %1908 = vrot.lane.b32.xlu0 %v1896, 88
    %v1909 = vpop.permute.xlu0 %1908
    %1910 = vrot.lane.b32.xlu0 %v1897, 88
    %v1911 = vpop.permute.xlu0 %1910
    %1912 = vrot.lane.b32.xlu0 %v1898, 88
    %v1913 = vpop.permute.xlu0 %1912
    %1914 = vrot.lane.b32.xlu0 %v1899, 88
    %v1915 = vpop.permute.xlu0 %1914
    %1916 = vrot.lane.b32.xlu0 %v1900, 88
    %v1917 = vpop.permute.xlu0 %1916
    %1918 = vrot.lane.b32.xlu0 %v1901, 88
    %v1919 = vpop.permute.xlu0 %1918
    %v1926 = vadd.f32 %v1796, %v1909
    %v1927 = vadd.f32 %v1799, %v1911
    %v1928 = vadd.f32 %v1804, %v1913
    %v1929 = vadd.f32 %v1807, %v1915
    %v1930 = vadd.f32 %v1812, %v1917
    %v1931 = vadd.f32 %v1815, %v1919
    %vm1932 = vcmask 261120
    %1933 = vst.msk [vmem:[#allocation10] sm:$0xff] %vm1932, %v706
    %1934 = vst.msk [vmem:[#allocation10 + $0x8] sm:$0xff] %vm1932, %v810
    %1935 = vst.msk [vmem:[#allocation10 + $0x10] sm:$0xff] %vm1932, %v914
    %1936 = vst.msk [vmem:[#allocation10 + $0x18] sm:$0xff] %vm1932, %v1018
    %1937 = vst.msk [vmem:[#allocation10 + $0x20] sm:$0xff] %vm1932, %v1122
    %1938 = vst.msk [vmem:[#allocation10 + $0x28] sm:$0xff] %vm1932, %v1226
    %1945 = vrot.lane.b32.xlu0 %v1796, 32
    %v1946 = vpop.permute.xlu0 %1945
    %1947 = vrot.lane.b32.xlu0 %v1799, 32
    %v1948 = vpop.permute.xlu0 %1947
    %1949 = vrot.lane.b32.xlu0 %v1804, 32
    %v1950 = vpop.permute.xlu0 %1949
    %1951 = vrot.lane.b32.xlu0 %v1807, 32
    %v1952 = vpop.permute.xlu0 %1951
    %1953 = vrot.lane.b32.xlu0 %v1812, 32
    %v1954 = vpop.permute.xlu0 %1953
    %1955 = vrot.lane.b32.xlu0 %v1815, 32
    %v1956 = vpop.permute.xlu0 %1955
    %vm1963 = vcmask 523520
    %1964 = vst.msk [vmem:[#allocation10] sm:$0xff] %vm1963, %v1946
    %1965 = vst.msk [vmem:[#allocation10 + $0x8] sm:$0xff] %vm1963, %v1948
    %1966 = vst.msk [vmem:[#allocation10 + $0x10] sm:$0xff] %vm1963, %v1950
    %1967 = vst.msk [vmem:[#allocation10 + $0x18] sm:$0xff] %vm1963, %v1952
    %1968 = vst.msk [vmem:[#allocation10 + $0x20] sm:$0xff] %vm1963, %v1954
    %1969 = vst.msk [vmem:[#allocation10 + $0x28] sm:$0xff] %vm1963, %v1956
    %1970 = vrot.lane.b32.xlu0 %v1866, 32
    %v1971 = vpop.permute.xlu0 %1970
    %1972 = vrot.lane.b32.xlu0 %v1867, 32
    %v1973 = vpop.permute.xlu0 %1972
    %1974 = vrot.lane.b32.xlu0 %v1868, 32
    %v1975 = vpop.permute.xlu0 %1974
    %1976 = vrot.lane.b32.xlu0 %v1869, 32
    %v1977 = vpop.permute.xlu0 %1976
    %1978 = vrot.lane.b32.xlu0 %v1870, 32
    %v1979 = vpop.permute.xlu0 %1978
    %1980 = vrot.lane.b32.xlu0 %v1871, 32
    %v1981 = vpop.permute.xlu0 %1980
    %vm1988 = vcmask 785920
    %1989 = vst.msk [vmem:[#allocation10] sm:$0xff] %vm1988, %v1971
    %1990 = vst.msk [vmem:[#allocation10 + $0x8] sm:$0xff] %vm1988, %v1973
    %1991 = vst.msk [vmem:[#allocation10 + $0x10] sm:$0xff] %vm1988, %v1975
    %1992 = vst.msk [vmem:[#allocation10 + $0x18] sm:$0xff] %vm1988, %v1977
    %1993 = vst.msk [vmem:[#allocation10 + $0x20] sm:$0xff] %vm1988, %v1979
    %1994 = vst.msk [vmem:[#allocation10 + $0x28] sm:$0xff] %vm1988, %v1981
    %2001 = vrot.lane.b32.xlu0 %v1926, 96
    %v2002 = vpop.permute.xlu0 %2001
    %2003 = vrot.lane.b32.xlu0 %v1927, 96
    %v2004 = vpop.permute.xlu0 %2003
    %2005 = vrot.lane.b32.xlu0 %v1928, 96
    %v2006 = vpop.permute.xlu0 %2005
    %2007 = vrot.lane.b32.xlu0 %v1929, 96
    %v2008 = vpop.permute.xlu0 %2007
    %2009 = vrot.lane.b32.xlu0 %v1930, 96
    %v2010 = vpop.permute.xlu0 %2009
    %2011 = vrot.lane.b32.xlu0 %v1931, 96
    %v2012 = vpop.permute.xlu0 %2011
    %vm2019 = vcmask 1048320
    %2020 = vst.msk [vmem:[#allocation10] sm:$0xff] %vm2019, %v2002
    %2021 = vst.msk [vmem:[#allocation10 + $0x8] sm:$0xff] %vm2019, %v2004
    %2022 = vst.msk [vmem:[#allocation10 + $0x10] sm:$0xff] %vm2019, %v2006
    %2023 = vst.msk [vmem:[#allocation10 + $0x18] sm:$0xff] %vm2019, %v2008
    %2024 = vst.msk [vmem:[#allocation10 + $0x20] sm:$0xff] %vm2019, %v2010
    %2025 = vst.msk [vmem:[#allocation10 + $0x28] sm:$0xff] %vm2019, %v2012
    // Predicated region
    $region34: #{tpu_custom_call.1} parent=1 // pred_check
      _
    $region35: #{tpu_custom_call.1} parent=1 // pred_check_branch
      %2027 = sbr.rel (0) target = $region37
    $region36: #{tpu_custom_call.1} parent=1 // pred_region
      %s2029 = ssub.s32 768, 768
      %2030 = vsyncadd [#allocation4], %s2029
      %s2031 = sshll.u32 [#allocation10], 4
      %s2032 = int_to_ptr.vmem [resolvable:$true] %s2031
      %2037 = dma.vmem_to_hbm [thread:$0]  %s2032, 768, %s4, [#allocation4], 128, 128, 8
    $region37: #{tpu_custom_call.1} parent=1 // pred_fallthru
      _
    // Predicated region
    $region38: #{tpu_custom_call.1} parent=1 // pred_check
      _
    $region39: #{tpu_custom_call.1} parent=1 // pred_check_branch
      %2039 = sbr.rel (0) target = $region41
    $region40: #{tpu_custom_call.1} parent=1 // pred_region
      %2040 = dma.done [#allocation4], 768
    $region41: #{tpu_custom_call.1} parent=1 // pred_fallthru
      _
    %2041 = vsyncpa [#allocation3], 1
    %2042 = vsyncpa [#allocation6], 1
    %2043 = vsyncpa [#allocation9], 1
    %2044 = vsyncpa [#allocation4], 1

</llo_original>
